<compile_context>
chip_gen: v7x
topology: tpu7x:2x2x1
jax: 0.10.0
libtpu: 0.0.40
codegen_flags: <defaults>
</compile_context>

<pallas_src>
import jax
import jax.numpy as jnp
from jax import lax
from jax.experimental import pallas as pl
from jax.experimental.pallas import tpu as pltpu

NEG_SLOPE = 0.01   # nn.LeakyReLU default negative_slope
BN_EPS = 1e-5      # nn.BatchNorm2d default eps


def up_conv_block_forward(x_nchw, params, out_filters, scale_factor):
    s0, s1 = scale_factor
    N, Cin, H, W = x_nchw.shape
    Cout = out_filters
    H2, W2 = H * s0, W * s1
    FC = W2 * Cout            # lane-folded (w2, c) width = 256 here (lane-dense)
    NH = N * H
    f32 = jnp.float32

    # -------- module-boundary layout conversion (input only, tiny) ------------
    # rows = (n, h), cols = (w, cin)
    x2 = jnp.transpose(x_nchw, (0, 2, 3, 1)).astype(f32).reshape(NH, W * Cin)

    # -------- parameter folding (tiny; precompute once in practice) -----------
    # (a) 1x1 upsample conv + 'b (c s0 s1) h w -> b c (h s0) (w s1)' rearrange,
    #     folded into one block matmul whose output columns are already in the
    #     lane-folded (i0, w2, c) order: plane i0 holds output rows h2 = s0*h+i0.
    w_up = params["w_up"].astype(f32)                                     # (Cin, Cout*s0*s1)
    b_up = params["b_up"].reshape(-1).astype(f32)
    w_r = jnp.transpose(w_up.reshape(Cin, Cout, s0, s1), (0, 2, 3, 1))    # (cin,i0,i1,c)
    eye_w = jnp.eye(W, dtype=f32)
    w_big = (eye_w[:, None, None, :, None, None] *
             w_r[None, :, :, None, :, :]).reshape(W * Cin, s0 * FC)       # (W*Cin, s0*FC)
    b_r = jnp.transpose(b_up.reshape(Cout, s0, s1), (1, 2, 0))            # (i0,i1,c)
    b_big = jnp.broadcast_to(b_r[:, None, :, :],
                             (s0, W, s1, Cout)).reshape(1, s0 * FC)

    # (b) 3x3 conv (padding=1): dx taps + channel mixing become three banded
    #     (FC, FC) weights (one per dy).  W-boundary zero padding is implicit.
    w1 = params["w1"].astype(f32)                                         # (3,3,Cout,Cout)
    w_band = jnp.stack(
        [sum(jnp.kron(jnp.eye(W2, k=1 - dx, dtype=f32), w1[dy, dx]) for dx in range(3))
         for dy in range(3)], axis=0)                                     # (3, FC, FC)
    b1_f = jnp.tile(params["b1"].reshape(-1).astype(f32), W2).reshape(1, FC)
    g1_f = jnp.tile(params["g1"].reshape(-1).astype(f32), W2).reshape(1, FC)
    be1_f = jnp.tile(params["be1"].reshape(-1).astype(f32), W2).reshape(1, FC)

    # (c) 1x1 conv_output -> block-diagonal (FC, FC) matmul.
    w2_blk = jnp.kron(jnp.eye(W2, dtype=f32), params["w2"].astype(f32))   # (FC, FC)
    b2_f = jnp.tile(params["b2"].reshape(-1).astype(f32), W2).reshape(1, FC)
    g2_f = jnp.tile(params["g2"].reshape(-1).astype(f32), W2).reshape(1, FC)
    be2_f = jnp.tile(params["be2"].reshape(-1).astype(f32), W2).reshape(1, FC)

    # (d) channel-tying matrix: one (1,FC)x(FC,FC) matmul both reduces the folded
    #     column sums per channel AND broadcasts them back to the folded layout.
    p_tie = jnp.kron(jnp.ones((W2, W2), f32), jnp.eye(Cout, dtype=f32))   # (FC, FC)

    # (e) row-shift matrices for the dy taps: zero padding at the top/bottom of
    #     each image and batch boundaries are baked in (block-diagonal over N).
    s_dn = jnp.kron(jnp.eye(N, dtype=f32), jnp.eye(H, k=-1, dtype=f32))   # row h-1
    s_up = jnp.kron(jnp.eye(N, dtype=f32), jnp.eye(H, k=1, dtype=f32))    # row h+1

    inv_n = 1.0 / float(N * H2 * W2)   # BN sample count per channel

    def kernel(x2_ref, wup_ref, bup_ref, sdn_ref, sup_ref, wband_ref,
               b1_ref, g1_ref, be1_ref, ptie_ref, w2_ref, b2_ref,
               g2_ref, be2_ref, o_ref):
        dot = lambda a, b: jnp.dot(a, b, preferred_element_type=jnp.float32)
        leaky = lambda a: jnp.where(a > 0, a, NEG_SLOPE * a)

        # 1x1 upsample conv + pixel shuffle (columns already (i0, w2, c) folded).
        y = dot(x2_ref[...], wup_ref[...]) + bup_ref[...]                 # (NH, s0*FC)
        planes = [y[:, i0 * FC:(i0 + 1) * FC] for i0 in range(s0)]        # each (NH, FC)

        # 3x3 conv, padding=1: per parity plane, three banded matmuls (dy taps);
        # the "row above/below" planes come from the tiny shift matmuls.
        prev_last = dot(sdn_ref[...], planes[s0 - 1])   # row h-1 of last plane
        next_first = dot(sup_ref[...], planes[0])       # row h+1 of first plane
        wb0, wb1, wb2 = wband_ref[0], wband_ref[1], wband_ref[2]

        conv = []
        for i0 in range(s0):
            top = planes[i0 - 1] if i0 > 0 else prev_last
            bot = planes[i0 + 1] if i0 < s0 - 1 else next_first
            conv.append(dot(top, wb0) + dot(planes[i0], wb1) +
                        dot(bot, wb2) + b1_ref[...])

        def batch_norm(acts, g_ref, be_ref):
            # training-mode BatchNorm2d: single pass (sum & sum-of-squares),
            # channel-tying matmul reduces + broadcasts the folded stats,
            # then one FMA per element with folded scale / offset.
            col_s = sum(jnp.sum(a, axis=0, keepdims=True) for a in acts)
            col_sq = sum(jnp.sum(a * a, axis=0, keepdims=True) for a in acts)
            mean = dot(col_s, ptie_ref[...]) * inv_n
            var = dot(col_sq, ptie_ref[...]) * inv_n - mean * mean
            scale = g_ref[...] * lax.rsqrt(var + BN_EPS)
            shift = be_ref[...] - mean * scale
            return [a * scale + shift for a in acts]

        h1 = batch_norm([leaky(c) for c in conv], g1_ref, be1_ref)

        # conv_output: 1x1 conv (block-diagonal matmul) + LeakyReLU + BatchNorm.
        a2 = [dot(h, w2_ref[...]) + b2_ref[...] for h in h1]
        out = batch_norm([leaky(a) for a in a2], g2_ref, be2_ref)

        for i0 in range(s0):
            o_ref[i0] = out[i0]

    # Single fused invocation; every operand (< ~1.5 MiB total) lives in VMEM,
    # and the output last dim (FC = 256) is a multiple of 128 -> unmasked vst.
    out = pl.pallas_call(
        kernel,
        out_shape=jax.ShapeDtypeStruct((s0, NH, FC), f32),
    )(x2, w_big, b_big, s_dn, s_up, w_band, b1_f, g1_f, be1_f,
      p_tie, w2_blk, b2_f, g2_f, be2_f)

    # Output boundary conversion back to NCHW (cheap wrapper reshape/transpose).
    out = out.reshape(s0, N, H, W2, Cout)            # (i0, n, h, w2, c)
    out = jnp.transpose(out, (1, 4, 2, 0, 3))        # (n, c, h, i0, w2)
    return out.reshape(N, Cout, H2, W2)


# ------------------------- plain-JAX reference --------------------------------
def reference_forward(x_nchw, params, out_filters, scale_factor):
    s0, s1 = scale_factor
    x = jnp.transpose(x_nchw, (0, 2, 3, 1)).astype(jnp.float32)
    N, H, W, _ = x.shape
    y = jnp.einsum("nhwc,cd->nhwd", x, params["w_up"], precision="highest")
    y = y + params["b_up"][0]
    y = y.reshape(N, H, W, out_filters, s0, s1)
    y = jnp.transpose(y, (0, 1, 4, 2, 5, 3)).reshape(N, H * s0, W * s1, out_filters)
    H2, W2 = H * s0, W * s1
    xpad = jnp.pad(y, ((0, 0), (1, 1), (1, 1), (0, 0)))
    acc = jnp.zeros((N, H2, W2, out_filters), jnp.float32)
    for dy in range(3):
        for dx in range(3):
            acc = acc + jnp.einsum("nhwc,cd->nhwd",
                                   xpad[:, dy:dy + H2, dx:dx + W2, :],
                                   params["w1"][dy, dx], precision="highest")
    acc = acc + params["b1"][0]
    h = jnp.where(acc > 0, acc, NEG_SLOPE * acc)
    mu = jnp.mean(h, axis=(0, 1, 2), keepdims=True)
    var = jnp.mean((h - mu) ** 2, axis=(0, 1, 2), keepdims=True)
    h = (h - mu) / jnp.sqrt(var + BN_EPS) * params["g1"][0] + params["be1"][0]
    acc2 = jnp.einsum("nhwc,cd->nhwd", h, params["w2"], precision="highest")
    acc2 = acc2 + params["b2"][0]
    h2 = jnp.where(acc2 > 0, acc2, NEG_SLOPE * acc2)
    mu2 = jnp.mean(h2, axis=(0, 1, 2), keepdims=True)
    var2 = jnp.mean((h2 - mu2) ** 2, axis=(0, 1, 2), keepdims=True)
    h2 = (h2 - mu2) / jnp.sqrt(var2 + BN_EPS) * params["g2"][0] + params["be2"][0]
    return jnp.transpose(h2, (0, 3, 1, 2))


if __name__ == "__main__":
    # UpConvBlock(in_filters=16, out_filters=8, dropout_rate=0.1,
    #             scale_factor=(2, 8), drop_out=False, skip_filters=0)
    in_filters, out_filters = 16, 8
    s0, s1 = 2, 8
    N, H, W = 2, 8, 4
    C1 = out_filters * s0 * s1                                    # = 128

    key = jax.random.PRNGKey(0)
    kx, kwu, kbu, kw1, kb1, kw2, kb2 = jax.random.split(key, 7)

    x = jax.random.normal(kx, (N, in_filters, H, W), jnp.float32)  # NCHW input

    params = {
        "w_up": 0.1 * jax.random.normal(kwu, (in_filters, C1), jnp.float32),
        "b_up": 0.01 * jax.random.normal(kbu, (1, C1), jnp.float32),
        "w1":   0.1 * jax.random.normal(kw1, (3, 3, out_filters, out_filters), jnp.float32),
        "b1":   0.01 * jax.random.normal(kb1, (1, out_filters), jnp.float32),
        "g1":   jnp.ones((1, out_filters), jnp.float32),           # BN defaults: weight=1
        "be1":  jnp.zeros((1, out_filters), jnp.float32),          #              bias=0
        "w2":   0.1 * jax.random.normal(kw2, (out_filters, out_filters), jnp.float32),
        "b2":   0.01 * jax.random.normal(kb2, (1, out_filters), jnp.float32),
        "g2":   jnp.ones((1, out_filters), jnp.float32),
        "be2":  jnp.zeros((1, out_filters), jnp.float32),
    }

    out = up_conv_block_forward(x, params, out_filters, (s0, s1))
    out = jax.block_until_ready(out)

    ref = jax.block_until_ready(reference_forward(x, params, out_filters, (s0, s1)))

    assert out.shape == (N, out_filters, H * s0, W * s1), out.shape
    assert jnp.allclose(out, ref, atol=2e-3, rtol=2e-3), \
        f"max abs diff {float(jnp.max(jnp.abs(out - ref)))}"
    print("KERNEL_OK")
</pallas_src>

<mosaic_0001>
module attributes {stable_mosaic.version = 11 : i64} {
  func.func @kernel(%arg0: memref<16x64xf32, #tpu.memory_space<vmem>>, %arg1: memref<64x512xf32, #tpu.memory_space<vmem>>, %arg2: memref<1x512xf32, #tpu.memory_space<vmem>>, %arg3: memref<16x16xf32, #tpu.memory_space<vmem>>, %arg4: memref<16x16xf32, #tpu.memory_space<vmem>>, %arg5: memref<3x256x256xf32, #tpu.memory_space<vmem>>, %arg6: memref<1x256xf32, #tpu.memory_space<vmem>>, %arg7: memref<1x256xf32, #tpu.memory_space<vmem>>, %arg8: memref<1x256xf32, #tpu.memory_space<vmem>>, %arg9: memref<256x256xf32, #tpu.memory_space<vmem>>, %arg10: memref<256x256xf32, #tpu.memory_space<vmem>>, %arg11: memref<1x256xf32, #tpu.memory_space<vmem>>, %arg12: memref<1x256xf32, #tpu.memory_space<vmem>>, %arg13: memref<1x256xf32, #tpu.memory_space<vmem>>, %arg14: memref<2x16x256xf32, #tpu.memory_space<vmem>>) attributes {dimension_semantics = [], scalar_prefetch = 0 : i64, scratch_operands = 0 : i64, tpu.core_type = #tpu.core_type<tc>} {
    %c0 = arith.constant 0 : index
    %c0_0 = arith.constant 0 : index
    %0 = vector.load %arg0[%c0, %c0_0] : memref<16x64xf32, #tpu.memory_space<vmem>>, vector<16x64xf32>
    %c0_1 = arith.constant 0 : index
    %c0_2 = arith.constant 0 : index
    %1 = vector.load %arg1[%c0_1, %c0_2] : memref<64x512xf32, #tpu.memory_space<vmem>>, vector<64x512xf32>
    %cst = arith.constant dense<0.000000e+00> : vector<16x512xf32>
    %2 = tpu.matmul %0, %1, %cst {dimension_numbers = #tpu.dot_dimension_numbers<[1], [0], [0], [1], [0, 0, 1, 1], [], []>} : vector<16x64xf32>, vector<64x512xf32>, vector<16x512xf32> -> vector<16x512xf32>
    %c0_3 = arith.constant 0 : index
    %c0_4 = arith.constant 0 : index
    %3 = vector.load %arg2[%c0_3, %c0_4] : memref<1x512xf32, #tpu.memory_space<vmem>>, vector<1x512xf32>
    %4 = vector.broadcast %3 : vector<1x512xf32> to vector<16x512xf32>
    %5 = arith.addf %2, %4 : vector<16x512xf32>
    %6 = vector.extract_strided_slice %5 {offsets = [0, 0], sizes = [16, 256], strides = [1, 1]} : vector<16x512xf32> to vector<16x256xf32>
    %7 = vector.extract_strided_slice %5 {offsets = [0, 256], sizes = [16, 256], strides = [1, 1]} : vector<16x512xf32> to vector<16x256xf32>
    %c0_5 = arith.constant 0 : index
    %c0_6 = arith.constant 0 : index
    %8 = vector.load %arg3[%c0_5, %c0_6] : memref<16x16xf32, #tpu.memory_space<vmem>>, vector<16x16xf32>
    %cst_7 = arith.constant dense<0.000000e+00> : vector<16x256xf32>
    %9 = tpu.matmul %8, %7, %cst_7 {dimension_numbers = #tpu.dot_dimension_numbers<[1], [0], [0], [1], [0, 0, 1, 1], [], []>} : vector<16x16xf32>, vector<16x256xf32>, vector<16x256xf32> -> vector<16x256xf32>
    %c0_8 = arith.constant 0 : index
    %c0_9 = arith.constant 0 : index
    %10 = vector.load %arg4[%c0_8, %c0_9] : memref<16x16xf32, #tpu.memory_space<vmem>>, vector<16x16xf32>
    %cst_10 = arith.constant dense<0.000000e+00> : vector<16x256xf32>
    %11 = tpu.matmul %10, %6, %cst_10 {dimension_numbers = #tpu.dot_dimension_numbers<[1], [0], [0], [1], [0, 0, 1, 1], [], []>} : vector<16x16xf32>, vector<16x256xf32>, vector<16x256xf32> -> vector<16x256xf32>
    %c0_11 = arith.constant 0 : index
    %c0_12 = arith.constant 0 : index
    %c0_13 = arith.constant 0 : index
    %12 = vector.load %arg5[%c0_11, %c0_12, %c0_13] : memref<3x256x256xf32, #tpu.memory_space<vmem>>, vector<1x256x256xf32>
    %13 = vector.shape_cast %12 : vector<1x256x256xf32> to vector<256x256xf32>
    %c1 = arith.constant 1 : index
    %c0_14 = arith.constant 0 : index
    %c0_15 = arith.constant 0 : index
    %14 = vector.load %arg5[%c1, %c0_14, %c0_15] : memref<3x256x256xf32, #tpu.memory_space<vmem>>, vector<1x256x256xf32>
    %15 = vector.shape_cast %14 : vector<1x256x256xf32> to vector<256x256xf32>
    %c2 = arith.constant 2 : index
    %c0_16 = arith.constant 0 : index
    %c0_17 = arith.constant 0 : index
    %16 = vector.load %arg5[%c2, %c0_16, %c0_17] : memref<3x256x256xf32, #tpu.memory_space<vmem>>, vector<1x256x256xf32>
    %17 = vector.shape_cast %16 : vector<1x256x256xf32> to vector<256x256xf32>
    %cst_18 = arith.constant dense<0.000000e+00> : vector<16x256xf32>
    %18 = tpu.matmul %9, %13, %cst_18 {dimension_numbers = #tpu.dot_dimension_numbers<[1], [0], [0], [1], [0, 0, 1, 1], [], []>} : vector<16x256xf32>, vector<256x256xf32>, vector<16x256xf32> -> vector<16x256xf32>
    %cst_19 = arith.constant dense<0.000000e+00> : vector<16x256xf32>
    %19 = tpu.matmul %6, %15, %cst_19 {dimension_numbers = #tpu.dot_dimension_numbers<[1], [0], [0], [1], [0, 0, 1, 1], [], []>} : vector<16x256xf32>, vector<256x256xf32>, vector<16x256xf32> -> vector<16x256xf32>
    %20 = arith.addf %18, %19 : vector<16x256xf32>
    %cst_20 = arith.constant dense<0.000000e+00> : vector<16x256xf32>
    %21 = tpu.matmul %7, %17, %cst_20 {dimension_numbers = #tpu.dot_dimension_numbers<[1], [0], [0], [1], [0, 0, 1, 1], [], []>} : vector<16x256xf32>, vector<256x256xf32>, vector<16x256xf32> -> vector<16x256xf32>
    %22 = arith.addf %20, %21 : vector<16x256xf32>
    %c0_21 = arith.constant 0 : index
    %c0_22 = arith.constant 0 : index
    %23 = vector.load %arg6[%c0_21, %c0_22] : memref<1x256xf32, #tpu.memory_space<vmem>>, vector<1x256xf32>
    %24 = vector.broadcast %23 : vector<1x256xf32> to vector<16x256xf32>
    %25 = arith.addf %22, %24 : vector<16x256xf32>
    %cst_23 = arith.constant dense<0.000000e+00> : vector<16x256xf32>
    %26 = tpu.matmul %6, %13, %cst_23 {dimension_numbers = #tpu.dot_dimension_numbers<[1], [0], [0], [1], [0, 0, 1, 1], [], []>} : vector<16x256xf32>, vector<256x256xf32>, vector<16x256xf32> -> vector<16x256xf32>
    %cst_24 = arith.constant dense<0.000000e+00> : vector<16x256xf32>
    %27 = tpu.matmul %7, %15, %cst_24 {dimension_numbers = #tpu.dot_dimension_numbers<[1], [0], [0], [1], [0, 0, 1, 1], [], []>} : vector<16x256xf32>, vector<256x256xf32>, vector<16x256xf32> -> vector<16x256xf32>
    %28 = arith.addf %26, %27 : vector<16x256xf32>
    %cst_25 = arith.constant dense<0.000000e+00> : vector<16x256xf32>
    %29 = tpu.matmul %11, %17, %cst_25 {dimension_numbers = #tpu.dot_dimension_numbers<[1], [0], [0], [1], [0, 0, 1, 1], [], []>} : vector<16x256xf32>, vector<256x256xf32>, vector<16x256xf32> -> vector<16x256xf32>
    %30 = arith.addf %28, %29 : vector<16x256xf32>
    %c0_26 = arith.constant 0 : index
    %c0_27 = arith.constant 0 : index
    %31 = vector.load %arg6[%c0_26, %c0_27] : memref<1x256xf32, #tpu.memory_space<vmem>>, vector<1x256xf32>
    %32 = vector.broadcast %31 : vector<1x256xf32> to vector<16x256xf32>
    %33 = arith.addf %30, %32 : vector<16x256xf32>
    %cst_28 = arith.constant 0.000000e+00 : f32
    %34 = vector.broadcast %cst_28 : f32 to vector<16x256xf32>
    %35 = arith.cmpf ogt, %25, %34 : vector<16x256xf32>
    %cst_29 = arith.constant 0.00999999977 : f32
    %36 = vector.broadcast %cst_29 : f32 to vector<16x256xf32>
    %37 = arith.mulf %36, %25 : vector<16x256xf32>
    %38 = arith.select %35, %25, %37 : vector<16x256xi1>, vector<16x256xf32>
    %cst_30 = arith.constant 0.000000e+00 : f32
    %39 = vector.broadcast %cst_30 : f32 to vector<16x256xf32>
    %40 = arith.cmpf ogt, %33, %39 : vector<16x256xf32>
    %cst_31 = arith.constant 0.00999999977 : f32
    %41 = vector.broadcast %cst_31 : f32 to vector<16x256xf32>
    %42 = arith.mulf %41, %33 : vector<16x256xf32>
    %43 = arith.select %40, %33, %42 : vector<16x256xi1>, vector<16x256xf32>
    %cst_32 = arith.constant dense<0.000000e+00> : vector<256xf32>
    %44 = vector.multi_reduction <add>, %38, %cst_32 [0] : vector<16x256xf32> to vector<256xf32>
    %45 = vector.shape_cast %44 : vector<256xf32> to vector<1x256xf32>
    %cst_33 = arith.constant 0.000000e+00 : f32
    %46 = vector.broadcast %cst_33 : f32 to vector<1x256xf32>
    %47 = arith.addf %46, %45 : vector<1x256xf32>
    %cst_34 = arith.constant dense<0.000000e+00> : vector<256xf32>
    %48 = vector.multi_reduction <add>, %43, %cst_34 [0] : vector<16x256xf32> to vector<256xf32>
    %49 = vector.shape_cast %48 : vector<256xf32> to vector<1x256xf32>
    %50 = arith.addf %47, %49 : vector<1x256xf32>
    %51 = arith.mulf %38, %38 : vector<16x256xf32>
    %cst_35 = arith.constant dense<0.000000e+00> : vector<256xf32>
    %52 = vector.multi_reduction <add>, %51, %cst_35 [0] : vector<16x256xf32> to vector<256xf32>
    %53 = vector.shape_cast %52 : vector<256xf32> to vector<1x256xf32>
    %cst_36 = arith.constant 0.000000e+00 : f32
    %54 = vector.broadcast %cst_36 : f32 to vector<1x256xf32>
    %55 = arith.addf %54, %53 : vector<1x256xf32>
    %56 = arith.mulf %43, %43 : vector<16x256xf32>
    %cst_37 = arith.constant dense<0.000000e+00> : vector<256xf32>
    %57 = vector.multi_reduction <add>, %56, %cst_37 [0] : vector<16x256xf32> to vector<256xf32>
    %58 = vector.shape_cast %57 : vector<256xf32> to vector<1x256xf32>
    %59 = arith.addf %55, %58 : vector<1x256xf32>
    %c0_38 = arith.constant 0 : index
    %c0_39 = arith.constant 0 : index
    %60 = vector.load %arg9[%c0_38, %c0_39] : memref<256x256xf32, #tpu.memory_space<vmem>>, vector<256x256xf32>
    %cst_40 = arith.constant dense<0.000000e+00> : vector<1x256xf32>
    %61 = tpu.matmul %50, %60, %cst_40 {dimension_numbers = #tpu.dot_dimension_numbers<[1], [0], [0], [1], [0, 0, 1, 1], [], []>} : vector<1x256xf32>, vector<256x256xf32>, vector<1x256xf32> -> vector<1x256xf32>
    %cst_41 = arith.constant 9.765625E-4 : f32
    %62 = vector.broadcast %cst_41 : f32 to vector<1x256xf32>
    %63 = arith.mulf %61, %62 : vector<1x256xf32>
    %c0_42 = arith.constant 0 : index
    %c0_43 = arith.constant 0 : index
    %64 = vector.load %arg9[%c0_42, %c0_43] : memref<256x256xf32, #tpu.memory_space<vmem>>, vector<256x256xf32>
    %cst_44 = arith.constant dense<0.000000e+00> : vector<1x256xf32>
    %65 = tpu.matmul %59, %64, %cst_44 {dimension_numbers = #tpu.dot_dimension_numbers<[1], [0], [0], [1], [0, 0, 1, 1], [], []>} : vector<1x256xf32>, vector<256x256xf32>, vector<1x256xf32> -> vector<1x256xf32>
    %cst_45 = arith.constant 9.765625E-4 : f32
    %66 = vector.broadcast %cst_45 : f32 to vector<1x256xf32>
    %67 = arith.mulf %65, %66 : vector<1x256xf32>
    %68 = arith.mulf %63, %63 : vector<1x256xf32>
    %69 = arith.subf %67, %68 : vector<1x256xf32>
    %c0_46 = arith.constant 0 : index
    %c0_47 = arith.constant 0 : index
    %70 = vector.load %arg7[%c0_46, %c0_47] : memref<1x256xf32, #tpu.memory_space<vmem>>, vector<1x256xf32>
    %cst_48 = arith.constant 9.99999974E-6 : f32
    %71 = vector.broadcast %cst_48 : f32 to vector<1x256xf32>
    %72 = arith.addf %69, %71 : vector<1x256xf32>
    %73 = math.rsqrt %72 : vector<1x256xf32>
    %74 = arith.mulf %70, %73 : vector<1x256xf32>
    %c0_49 = arith.constant 0 : index
    %c0_50 = arith.constant 0 : index
    %75 = vector.load %arg8[%c0_49, %c0_50] : memref<1x256xf32, #tpu.memory_space<vmem>>, vector<1x256xf32>
    %76 = arith.mulf %63, %74 : vector<1x256xf32>
    %77 = arith.subf %75, %76 : vector<1x256xf32>
    %78 = vector.broadcast %74 : vector<1x256xf32> to vector<16x256xf32>
    %79 = arith.mulf %38, %78 : vector<16x256xf32>
    %80 = vector.broadcast %77 : vector<1x256xf32> to vector<16x256xf32>
    %81 = arith.addf %79, %80 : vector<16x256xf32>
    %82 = vector.broadcast %74 : vector<1x256xf32> to vector<16x256xf32>
    %83 = arith.mulf %43, %82 : vector<16x256xf32>
    %84 = vector.broadcast %77 : vector<1x256xf32> to vector<16x256xf32>
    %85 = arith.addf %83, %84 : vector<16x256xf32>
    %c0_51 = arith.constant 0 : index
    %c0_52 = arith.constant 0 : index
    %86 = vector.load %arg10[%c0_51, %c0_52] : memref<256x256xf32, #tpu.memory_space<vmem>>, vector<256x256xf32>
    %cst_53 = arith.constant dense<0.000000e+00> : vector<16x256xf32>
    %87 = tpu.matmul %81, %86, %cst_53 {dimension_numbers = #tpu.dot_dimension_numbers<[1], [0], [0], [1], [0, 0, 1, 1], [], []>} : vector<16x256xf32>, vector<256x256xf32>, vector<16x256xf32> -> vector<16x256xf32>
    %c0_54 = arith.constant 0 : index
    %c0_55 = arith.constant 0 : index
    %88 = vector.load %arg11[%c0_54, %c0_55] : memref<1x256xf32, #tpu.memory_space<vmem>>, vector<1x256xf32>
    %89 = vector.broadcast %88 : vector<1x256xf32> to vector<16x256xf32>
    %90 = arith.addf %87, %89 : vector<16x256xf32>
    %c0_56 = arith.constant 0 : index
    %c0_57 = arith.constant 0 : index
    %91 = vector.load %arg10[%c0_56, %c0_57] : memref<256x256xf32, #tpu.memory_space<vmem>>, vector<256x256xf32>
    %cst_58 = arith.constant dense<0.000000e+00> : vector<16x256xf32>
    %92 = tpu.matmul %85, %91, %cst_58 {dimension_numbers = #tpu.dot_dimension_numbers<[1], [0], [0], [1], [0, 0, 1, 1], [], []>} : vector<16x256xf32>, vector<256x256xf32>, vector<16x256xf32> -> vector<16x256xf32>
    %c0_59 = arith.constant 0 : index
    %c0_60 = arith.constant 0 : index
    %93 = vector.load %arg11[%c0_59, %c0_60] : memref<1x256xf32, #tpu.memory_space<vmem>>, vector<1x256xf32>
    %94 = vector.broadcast %93 : vector<1x256xf32> to vector<16x256xf32>
    %95 = arith.addf %92, %94 : vector<16x256xf32>
    %cst_61 = arith.constant 0.000000e+00 : f32
    %96 = vector.broadcast %cst_61 : f32 to vector<16x256xf32>
    %97 = arith.cmpf ogt, %90, %96 : vector<16x256xf32>
    %cst_62 = arith.constant 0.00999999977 : f32
    %98 = vector.broadcast %cst_62 : f32 to vector<16x256xf32>
    %99 = arith.mulf %98, %90 : vector<16x256xf32>
    %100 = arith.select %97, %90, %99 : vector<16x256xi1>, vector<16x256xf32>
    %cst_63 = arith.constant 0.000000e+00 : f32
    %101 = vector.broadcast %cst_63 : f32 to vector<16x256xf32>
    %102 = arith.cmpf ogt, %95, %101 : vector<16x256xf32>
    %cst_64 = arith.constant 0.00999999977 : f32
    %103 = vector.broadcast %cst_64 : f32 to vector<16x256xf32>
    %104 = arith.mulf %103, %95 : vector<16x256xf32>
    %105 = arith.select %102, %95, %104 : vector<16x256xi1>, vector<16x256xf32>
    %cst_65 = arith.constant dense<0.000000e+00> : vector<256xf32>
    %106 = vector.multi_reduction <add>, %100, %cst_65 [0] : vector<16x256xf32> to vector<256xf32>
    %107 = vector.shape_cast %106 : vector<256xf32> to vector<1x256xf32>
    %cst_66 = arith.constant 0.000000e+00 : f32
    %108 = vector.broadcast %cst_66 : f32 to vector<1x256xf32>
    %109 = arith.addf %108, %107 : vector<1x256xf32>
    %cst_67 = arith.constant dense<0.000000e+00> : vector<256xf32>
    %110 = vector.multi_reduction <add>, %105, %cst_67 [0] : vector<16x256xf32> to vector<256xf32>
    %111 = vector.shape_cast %110 : vector<256xf32> to vector<1x256xf32>
    %112 = arith.addf %109, %111 : vector<1x256xf32>
    %113 = arith.mulf %100, %100 : vector<16x256xf32>
    %cst_68 = arith.constant dense<0.000000e+00> : vector<256xf32>
    %114 = vector.multi_reduction <add>, %113, %cst_68 [0] : vector<16x256xf32> to vector<256xf32>
    %115 = vector.shape_cast %114 : vector<256xf32> to vector<1x256xf32>
    %cst_69 = arith.constant 0.000000e+00 : f32
    %116 = vector.broadcast %cst_69 : f32 to vector<1x256xf32>
    %117 = arith.addf %116, %115 : vector<1x256xf32>
    %118 = arith.mulf %105, %105 : vector<16x256xf32>
    %cst_70 = arith.constant dense<0.000000e+00> : vector<256xf32>
    %119 = vector.multi_reduction <add>, %118, %cst_70 [0] : vector<16x256xf32> to vector<256xf32>
    %120 = vector.shape_cast %119 : vector<256xf32> to vector<1x256xf32>
    %121 = arith.addf %117, %120 : vector<1x256xf32>
    %c0_71 = arith.constant 0 : index
    %c0_72 = arith.constant 0 : index
    %122 = vector.load %arg9[%c0_71, %c0_72] : memref<256x256xf32, #tpu.memory_space<vmem>>, vector<256x256xf32>
    %cst_73 = arith.constant dense<0.000000e+00> : vector<1x256xf32>
    %123 = tpu.matmul %112, %122, %cst_73 {dimension_numbers = #tpu.dot_dimension_numbers<[1], [0], [0], [1], [0, 0, 1, 1], [], []>} : vector<1x256xf32>, vector<256x256xf32>, vector<1x256xf32> -> vector<1x256xf32>
    %cst_74 = arith.constant 9.765625E-4 : f32
    %124 = vector.broadcast %cst_74 : f32 to vector<1x256xf32>
    %125 = arith.mulf %123, %124 : vector<1x256xf32>
    %c0_75 = arith.constant 0 : index
    %c0_76 = arith.constant 0 : index
    %126 = vector.load %arg9[%c0_75, %c0_76] : memref<256x256xf32, #tpu.memory_space<vmem>>, vector<256x256xf32>
    %cst_77 = arith.constant dense<0.000000e+00> : vector<1x256xf32>
    %127 = tpu.matmul %121, %126, %cst_77 {dimension_numbers = #tpu.dot_dimension_numbers<[1], [0], [0], [1], [0, 0, 1, 1], [], []>} : vector<1x256xf32>, vector<256x256xf32>, vector<1x256xf32> -> vector<1x256xf32>
    %cst_78 = arith.constant 9.765625E-4 : f32
    %128 = vector.broadcast %cst_78 : f32 to vector<1x256xf32>
    %129 = arith.mulf %127, %128 : vector<1x256xf32>
    %130 = arith.mulf %125, %125 : vector<1x256xf32>
    %131 = arith.subf %129, %130 : vector<1x256xf32>
    %c0_79 = arith.constant 0 : index
    %c0_80 = arith.constant 0 : index
    %132 = vector.load %arg12[%c0_79, %c0_80] : memref<1x256xf32, #tpu.memory_space<vmem>>, vector<1x256xf32>
    %cst_81 = arith.constant 9.99999974E-6 : f32
    %133 = vector.broadcast %cst_81 : f32 to vector<1x256xf32>
    %134 = arith.addf %131, %133 : vector<1x256xf32>
    %135 = math.rsqrt %134 : vector<1x256xf32>
    %136 = arith.mulf %132, %135 : vector<1x256xf32>
    %c0_82 = arith.constant 0 : index
    %c0_83 = arith.constant 0 : index
    %137 = vector.load %arg13[%c0_82, %c0_83] : memref<1x256xf32, #tpu.memory_space<vmem>>, vector<1x256xf32>
    %138 = arith.mulf %125, %136 : vector<1x256xf32>
    %139 = arith.subf %137, %138 : vector<1x256xf32>
    %140 = vector.broadcast %136 : vector<1x256xf32> to vector<16x256xf32>
    %141 = arith.mulf %100, %140 : vector<16x256xf32>
    %142 = vector.broadcast %139 : vector<1x256xf32> to vector<16x256xf32>
    %143 = arith.addf %141, %142 : vector<16x256xf32>
    %144 = vector.broadcast %136 : vector<1x256xf32> to vector<16x256xf32>
    %145 = arith.mulf %105, %144 : vector<16x256xf32>
    %146 = vector.broadcast %139 : vector<1x256xf32> to vector<16x256xf32>
    %147 = arith.addf %145, %146 : vector<16x256xf32>
    %c0_84 = arith.constant 0 : index
    %c0_85 = arith.constant 0 : index
    %c0_86 = arith.constant 0 : index
    %148 = vector.load %arg14[%c0_84, %c0_85, %c0_86] : memref<2x16x256xf32, #tpu.memory_space<vmem>>, vector<1x16x256xf32>
    %149 = vector.shape_cast %148 : vector<1x16x256xf32> to vector<16x256xf32>
    %150 = vector.shape_cast %143 : vector<16x256xf32> to vector<1x16x256xf32>
    tpu.vector_store %arg14[%c0_84, %c0_85, %c0_86], %150 {strides = array<i32>} : memref<2x16x256xf32, #tpu.memory_space<vmem>>, vector<1x16x256xf32>,
    %c1_87 = arith.constant 1 : index
    %c0_88 = arith.constant 0 : index
    %c0_89 = arith.constant 0 : index
    %151 = vector.load %arg14[%c1_87, %c0_88, %c0_89] : memref<2x16x256xf32, #tpu.memory_space<vmem>>, vector<1x16x256xf32>
    %152 = vector.shape_cast %151 : vector<1x16x256xf32> to vector<16x256xf32>
    %153 = vector.shape_cast %147 : vector<16x256xf32> to vector<1x16x256xf32>
    tpu.vector_store %arg14[%c1_87, %c0_88, %c0_89], %153 {strides = array<i32>} : memref<2x16x256xf32, #tpu.memory_space<vmem>>, vector<1x16x256xf32>,
    return
  }
}

</mosaic_0001>

<llo_original>
// kernel: tpu_custom_call.1
$region0: #{tpu_custom_call.1}
  #allocation0 [shape = 'u32[]', space=smem, size = 0x4, offset = 0x4, fixed_abs, tag = 'smem constant byte address 0x4 - core index']
  #allocation1 [shape = 'u32[144,128]{1,0:T(1,128)}', space=vmem, size = 0x12000, scoped, tag = 'internal scratch']
  %s0 = inlined_call_operand.hbm [shape: f32[16,64], index: 0, kind: input, shape index: {}]
  %s1 = inlined_call_operand.hbm [shape: f32[64,512], index: 1, kind: input, shape index: {}]
  %s2 = inlined_call_operand.vmem [shape: f32[1,512], index: 2, kind: input, shape index: {}]
  %s3 = inlined_call_operand.hbm [shape: f32[16,16], index: 3, kind: input, shape index: {}]
  %s4 = inlined_call_operand.hbm [shape: f32[16,16], index: 4, kind: input, shape index: {}]
  %s5 = inlined_call_operand.hbm [shape: f32[3,256,256], index: 5, kind: input, shape index: {}]
  %s6 = inlined_call_operand.vmem [shape: f32[1,256], index: 6, kind: input, shape index: {}]
  %s7 = inlined_call_operand.vmem [shape: f32[1,256], index: 7, kind: input, shape index: {}]
  %s8 = inlined_call_operand.vmem [shape: f32[1,256], index: 8, kind: input, shape index: {}]
  %s9 = inlined_call_operand.hbm [shape: f32[256,256], index: 9, kind: input, shape index: {}]
  %s10 = inlined_call_operand.hbm [shape: f32[256,256], index: 10, kind: input, shape index: {}]
  %s11 = inlined_call_operand.vmem [shape: f32[1,256], index: 11, kind: input, shape index: {}]
  %s12 = inlined_call_operand.vmem [shape: f32[1,256], index: 12, kind: input, shape index: {}]
  %s13 = inlined_call_operand.vmem [shape: f32[1,256], index: 13, kind: input, shape index: {}]
  %s14 = inlined_call_operand.hbm [shape: f32[2,16,256], index: 14, kind: output, shape index: {}]
  %s15 = sld [smem:[#allocation0]]
  $region94: #{tpu_custom_call.1} parent=0
    _
  %s17 = ssub.s32 1, %s15
  %s18 = scalar_select 0, %s17, %s15
  $region1: #{tpu_custom_call.1} parent=0
    #allocation2 [shape = 'u8[8192]{0}', space=vmem, size = 0x2000, scoped, tag = 'input window, operand 0, single buffered']
    #allocation3 [shape = 's32[1]{0}', space=sflag, size = 0x4, scoped, tag = 'scoped memory for tpu_custom_call.1']
    #allocation4 [shape = 's32[1]{0}', space=sflag, size = 0x4, scoped, tag = 'scoped memory for tpu_custom_call.1']
    #allocation5 [shape = 'u8[131072]{0}', space=vmem, size = 0x20000, scoped, tag = 'input window, operand 1, single buffered']
    #allocation6 [shape = 's32[1]{0}', space=sflag, size = 0x4, scoped, tag = 'scoped memory for tpu_custom_call.1']
    #allocation7 [shape = 'u8[8192]{0}', space=vmem, size = 0x2000, scoped, tag = 'input window, operand 3, single buffered']
    #allocation8 [shape = 'u8[8192]{0}', space=vmem, size = 0x2000, scoped, tag = 'input window, operand 4, single buffered']
    #allocation9 [shape = 's32[1]{0}', space=sflag, size = 0x4, scoped, tag = 'scoped memory for tpu_custom_call.1']
    #allocation10 [shape = 'u8[786432]{0}', space=vmem, size = 0xc0000, scoped, tag = 'input window, operand 5, single buffered']
    #allocation11 [shape = 'u8[262144]{0}', space=vmem, size = 0x40000, scoped, tag = 'input window, operand 9, single buffered']
    #allocation12 [shape = 's32[1]{0}', space=sflag, size = 0x4, scoped, tag = 'scoped memory for tpu_custom_call.1']
    #allocation13 [shape = 'u8[262144]{0}', space=vmem, size = 0x40000, scoped, tag = 'input window, operand 10, single buffered']
    #allocation14 [shape = 'u8[32768]{0}', space=vmem, size = 0x8000, scoped, tag = 'output window, operand 0, single buffered']
    %19 = vsyncpa [#allocation3], 0
    %20 = vsyncpa [#allocation6], 0
    %21 = vsyncpa [#allocation9], 0
    %22 = vsyncpa [#allocation12], 0
    %23 = vsyncpa [#allocation4], 0
    // Predicated region
    $region2: #{tpu_custom_call.1} parent=1 // pred_check
      _
    $region3: #{tpu_custom_call.1} parent=1 // pred_check_branch
      %25 = sbr.rel (0) target = $region5
    $region4: #{tpu_custom_call.1} parent=1 // pred_region
      %s27 = ssub.s32 256, 256
      %28 = vsyncadd [#allocation3], %s27
      %s29 = sshll.u32 [#allocation2], 4
      %s30 = int_to_ptr.vmem [resolvable:$true] %s29
      %35 = dma.hbm_to_vmem [thread:$0]  %s0, 256, %s30, [#allocation3], 128, 128, 8
    $region5: #{tpu_custom_call.1} parent=1 // pred_fallthru
      _
    // Predicated region
    $region6: #{tpu_custom_call.1} parent=1 // pred_check
      _
    $region7: #{tpu_custom_call.1} parent=1 // pred_check_branch
      %37 = sbr.rel (0) target = $region9
    $region8: #{tpu_custom_call.1} parent=1 // pred_region
      %s39 = ssub.s32 4096, 4096
      %40 = vsyncadd [#allocation6], %s39
      %s41 = sshll.u32 [#allocation5], 4
      %s42 = int_to_ptr.vmem [resolvable:$true] %s41
      %47 = dma.hbm_to_vmem [thread:$0]  %s1, 4096, %s42, [#allocation6], 512, 512, 32
    $region9: #{tpu_custom_call.1} parent=1 // pred_fallthru
      _
    // Predicated region
    $region10: #{tpu_custom_call.1} parent=1 // pred_check
      _
    $region11: #{tpu_custom_call.1} parent=1 // pred_check_branch
      %49 = sbr.rel (0) target = $region13
    $region12: #{tpu_custom_call.1} parent=1 // pred_region
      _
    $region13: #{tpu_custom_call.1} parent=1 // pred_fallthru
      _
    // Predicated region
    $region14: #{tpu_custom_call.1} parent=1 // pred_check
      _
    $region15: #{tpu_custom_call.1} parent=1 // pred_check_branch
      %51 = sbr.rel (0) target = $region17
    $region16: #{tpu_custom_call.1} parent=1 // pred_region
      %s53 = ssub.s32 256, 256
      %54 = vsyncadd [#allocation6], %s53
      %s55 = sshll.u32 [#allocation7], 4
      %s56 = int_to_ptr.vmem [resolvable:$true] %s55
      %61 = dma.hbm_to_vmem [thread:$0]  %s3, 256, %s56, [#allocation6], 128, 128, 8
    $region17: #{tpu_custom_call.1} parent=1 // pred_fallthru
      _
    // Predicated region
    $region18: #{tpu_custom_call.1} parent=1 // pred_check
      _
    $region19: #{tpu_custom_call.1} parent=1 // pred_check_branch
      %63 = sbr.rel (0) target = $region21
    $region20: #{tpu_custom_call.1} parent=1 // pred_region
      %s65 = ssub.s32 256, 256
      %66 = vsyncadd [#allocation9], %s65
      %s67 = sshll.u32 [#allocation8], 4
      %s68 = int_to_ptr.vmem [resolvable:$true] %s67
      %73 = dma.hbm_to_vmem [thread:$0]  %s4, 256, %s68, [#allocation9], 128, 128, 8
    $region21: #{tpu_custom_call.1} parent=1 // pred_fallthru
      _
    // Predicated region
    $region22: #{tpu_custom_call.1} parent=1 // pred_check
      _
    $region23: #{tpu_custom_call.1} parent=1 // pred_check_branch
      %75 = sbr.rel (0) target = $region25
    $region24: #{tpu_custom_call.1} parent=1 // pred_region
      %s77 = ssub.s32 24576, 24576
      %78 = vsyncadd [#allocation9], %s77
      %s79 = sshll.u32 [#allocation10], 4
      %s80 = int_to_ptr.vmem [resolvable:$true] %s79
      %85 = dma.hbm_to_vmem [thread:$0]  %s5, 24576, %s80, [#allocation9], 256, 256, 16
    $region25: #{tpu_custom_call.1} parent=1 // pred_fallthru
      _
    // Predicated region
    $region26: #{tpu_custom_call.1} parent=1 // pred_check
      _
    $region27: #{tpu_custom_call.1} parent=1 // pred_check_branch
      %87 = sbr.rel (0) target = $region29
    $region28: #{tpu_custom_call.1} parent=1 // pred_region
      _
    $region29: #{tpu_custom_call.1} parent=1 // pred_fallthru
      _
    // Predicated region
    $region30: #{tpu_custom_call.1} parent=1 // pred_check
      _
    $region31: #{tpu_custom_call.1} parent=1 // pred_check_branch
      %89 = sbr.rel (0) target = $region33
    $region32: #{tpu_custom_call.1} parent=1 // pred_region
      _
    $region33: #{tpu_custom_call.1} parent=1 // pred_fallthru
      _
    // Predicated region
    $region34: #{tpu_custom_call.1} parent=1 // pred_check
      _
    $region35: #{tpu_custom_call.1} parent=1 // pred_check_branch
      %91 = sbr.rel (0) target = $region37
    $region36: #{tpu_custom_call.1} parent=1 // pred_region
      _
    $region37: #{tpu_custom_call.1} parent=1 // pred_fallthru
      _
    // Predicated region
    $region38: #{tpu_custom_call.1} parent=1 // pred_check
      _
    $region39: #{tpu_custom_call.1} parent=1 // pred_check_branch
      %93 = sbr.rel (0) target = $region41
    $region40: #{tpu_custom_call.1} parent=1 // pred_region
      %s95 = ssub.s32 8192, 8192
      %96 = vsyncadd [#allocation12], %s95
      %s97 = sshll.u32 [#allocation11], 4
      %s98 = int_to_ptr.vmem [resolvable:$true] %s97
      %103 = dma.hbm_to_vmem [thread:$0]  %s9, 8192, %s98, [#allocation12], 256, 256, 16
    $region41: #{tpu_custom_call.1} parent=1 // pred_fallthru
      _
    // Predicated region
    $region42: #{tpu_custom_call.1} parent=1 // pred_check
      _
    $region43: #{tpu_custom_call.1} parent=1 // pred_check_branch
      %105 = sbr.rel (0) target = $region45
    $region44: #{tpu_custom_call.1} parent=1 // pred_region
      %s107 = ssub.s32 8192, 8192
      %108 = vsyncadd [#allocation12], %s107
      %s109 = sshll.u32 [#allocation13], 4
      %s110 = int_to_ptr.vmem [resolvable:$true] %s109
      %115 = dma.hbm_to_vmem [thread:$0]  %s10, 8192, %s110, [#allocation12], 256, 256, 16
    $region45: #{tpu_custom_call.1} parent=1 // pred_fallthru
      _
    // Predicated region
    $region46: #{tpu_custom_call.1} parent=1 // pred_check
      _
    $region47: #{tpu_custom_call.1} parent=1 // pred_check_branch
      %117 = sbr.rel (0) target = $region49
    $region48: #{tpu_custom_call.1} parent=1 // pred_region
      _
    $region49: #{tpu_custom_call.1} parent=1 // pred_fallthru
      _
    // Predicated region
    $region50: #{tpu_custom_call.1} parent=1 // pred_check
      _
    $region51: #{tpu_custom_call.1} parent=1 // pred_check_branch
      %119 = sbr.rel (0) target = $region53
    $region52: #{tpu_custom_call.1} parent=1 // pred_region
      _
    $region53: #{tpu_custom_call.1} parent=1 // pred_fallthru
      _
    // Predicated region
    $region54: #{tpu_custom_call.1} parent=1 // pred_check
      _
    $region55: #{tpu_custom_call.1} parent=1 // pred_check_branch
      %121 = sbr.rel (0) target = $region57
    $region56: #{tpu_custom_call.1} parent=1 // pred_region
      _
    $region57: #{tpu_custom_call.1} parent=1 // pred_fallthru
      _
    // Predicated region
    $region58: #{tpu_custom_call.1} parent=1 // pred_check
      _
    $region59: #{tpu_custom_call.1} parent=1 // pred_check_branch
      %123 = sbr.rel (0) target = $region61
    $region60: #{tpu_custom_call.1} parent=1 // pred_region
      %124 = dma.done [#allocation3], 256
    $region61: #{tpu_custom_call.1} parent=1 // pred_fallthru
      _
    // Predicated region
    $region62: #{tpu_custom_call.1} parent=1 // pred_check
      _
    $region63: #{tpu_custom_call.1} parent=1 // pred_check_branch
      %126 = sbr.rel (0) target = $region65
    $region64: #{tpu_custom_call.1} parent=1 // pred_region
      %127 = dma.done [#allocation6], 4096
    $region65: #{tpu_custom_call.1} parent=1 // pred_fallthru
      _
    // Predicated region
    $region66: #{tpu_custom_call.1} parent=1 // pred_check
      _
    $region67: #{tpu_custom_call.1} parent=1 // pred_check_branch
      %129 = sbr.rel (0) target = $region69
    $region68: #{tpu_custom_call.1} parent=1 // pred_region
      %130 = dma.done [#allocation6], 256
    $region69: #{tpu_custom_call.1} parent=1 // pred_fallthru
      _
    // Predicated region
    $region70: #{tpu_custom_call.1} parent=1 // pred_check
      _
    $region71: #{tpu_custom_call.1} parent=1 // pred_check_branch
      %132 = sbr.rel (0) target = $region73
    $region72: #{tpu_custom_call.1} parent=1 // pred_region
      %133 = dma.done [#allocation9], 256
    $region73: #{tpu_custom_call.1} parent=1 // pred_fallthru
      _
    // Predicated region
    $region74: #{tpu_custom_call.1} parent=1 // pred_check
      _
    $region75: #{tpu_custom_call.1} parent=1 // pred_check_branch
      %135 = sbr.rel (0) target = $region77
    $region76: #{tpu_custom_call.1} parent=1 // pred_region
      %136 = dma.done [#allocation9], 24576
    $region77: #{tpu_custom_call.1} parent=1 // pred_fallthru
      _
    // Predicated region
    $region78: #{tpu_custom_call.1} parent=1 // pred_check
      _
    $region79: #{tpu_custom_call.1} parent=1 // pred_check_branch
      %138 = sbr.rel (0) target = $region81
    $region80: #{tpu_custom_call.1} parent=1 // pred_region
      %139 = dma.done [#allocation12], 8192
    $region81: #{tpu_custom_call.1} parent=1 // pred_fallthru
      _
    // Predicated region
    $region82: #{tpu_custom_call.1} parent=1 // pred_check
      _
    $region83: #{tpu_custom_call.1} parent=1 // pred_check_branch
      %141 = sbr.rel (0) target = $region85
    $region84: #{tpu_custom_call.1} parent=1 // pred_region
      %142 = dma.done [#allocation12], 8192
    $region85: #{tpu_custom_call.1} parent=1 // pred_fallthru
      _
    %v143 = vld [vmem:[#allocation2] sm:$0xff]
    %v144 = vld [vmem:[#allocation2 + $0x8] sm:$0xff]
    %v145 = vld [vmem:[#allocation5] sm:$0xff]
    %v146 = vld [vmem:[#allocation5 + $0x8] sm:$0xff]
    %v147 = vld [vmem:[#allocation5 + $0x10] sm:$0xff]
    %v148 = vld [vmem:[#allocation5 + $0x18] sm:$0xff]
    %v149 = vld [vmem:[#allocation5 + $0x20] sm:$0xff]
    %v150 = vld [vmem:[#allocation5 + $0x28] sm:$0xff]
    %v151 = vld [vmem:[#allocation5 + $0x30] sm:$0xff]
    %v152 = vld [vmem:[#allocation5 + $0x38] sm:$0xff]
    %v153 = vld [vmem:[#allocation5 + $0x40] sm:$0xff]
    %v154 = vld [vmem:[#allocation5 + $0x48] sm:$0xff]
    %v155 = vld [vmem:[#allocation5 + $0x50] sm:$0xff]
    %v156 = vld [vmem:[#allocation5 + $0x58] sm:$0xff]
    %v157 = vld [vmem:[#allocation5 + $0x60] sm:$0xff]
    %v158 = vld [vmem:[#allocation5 + $0x68] sm:$0xff]
    %v159 = vld [vmem:[#allocation5 + $0x70] sm:$0xff]
    %v160 = vld [vmem:[#allocation5 + $0x78] sm:$0xff]
    %v161 = vld [vmem:[#allocation5 + $0x80] sm:$0xff]
    %v162 = vld [vmem:[#allocation5 + $0x88] sm:$0xff]
    %v163 = vld [vmem:[#allocation5 + $0x90] sm:$0xff]
    %v164 = vld [vmem:[#allocation5 + $0x98] sm:$0xff]
    %v165 = vld [vmem:[#allocation5 + $0xa0] sm:$0xff]
    %v166 = vld [vmem:[#allocation5 + $0xa8] sm:$0xff]
    %v167 = vld [vmem:[#allocation5 + $0xb0] sm:$0xff]
    %v168 = vld [vmem:[#allocation5 + $0xb8] sm:$0xff]
    %v169 = vld [vmem:[#allocation5 + $0xc0] sm:$0xff]
    %v170 = vld [vmem:[#allocation5 + $0xc8] sm:$0xff]
    %v171 = vld [vmem:[#allocation5 + $0xd0] sm:$0xff]
    %v172 = vld [vmem:[#allocation5 + $0xd8] sm:$0xff]
    %v173 = vld [vmem:[#allocation5 + $0xe0] sm:$0xff]
    %v174 = vld [vmem:[#allocation5 + $0xe8] sm:$0xff]
    %v175 = vld [vmem:[#allocation5 + $0xf0] sm:$0xff]
    %v176 = vld [vmem:[#allocation5 + $0xf8] sm:$0xff]
    %v177 = vld [vmem:[%s2] sm:$0xf]
    %v179 = vlaneseq
    %v180 = vshrl.u32 %v179, 7
    %v181 = vsub.s32 0, %v180
    %v182 = vrot.slane %v177, %v181
    %v183 = vlaneseq
    %v184 = vshrl.u32 %v183, 7
    %v185 = vsub.s32 1, %v184
    %v186 = vrot.slane %v177, %v185
    %v187 = vlaneseq
    %v188 = vshrl.u32 %v187, 7
    %v189 = vsub.s32 2, %v188
    %v190 = vrot.slane %v177, %v189
    %v191 = vlaneseq
    %v192 = vshrl.u32 %v191, 7
    %v193 = vsub.s32 3, %v192
    %v194 = vrot.slane %v177, %v193
    %vm199 = vcmask 523264
    %v201 = vsel %vm199, %v143, 0
    %v204 = vsel %vm199, %v144, 0
    %206 = vmatprep.subr.mxu0 %v146
    %207 = vmatpush1.msra.mxu0 %v145
    %208 = vmatprep.subr.mxu0 %v150
    %209 = vmatpush1.msra.mxu0 %v149
    %210 = vmatprep.subr.mxu0 %v154
    %211 = vmatpush1.msra.mxu0 %v153
    %212 = vmatprep.subr.mxu0 %v158
    %213 = vmatpush1.msra.mxu0 %v157
    %214 = vmatprep.subr.mxu0 %v162
    %215 = vmatpush1.msra.mxu0 %v161
    %216 = vmatprep.subr.mxu0 %v166
    %217 = vmatpush1.msra.mxu0 %v165
    %218 = vmatprep.subr.mxu0 %v170
    %219 = vmatpush1.msra.mxu0 %v169
    %220 = vmatprep.subr.mxu0 %v174
    %221 = vmatpush1.msra.mxu0 %v173
    %222 = vmatprep.subr.mxu0 0.0
    %223 = vmatpush1.msra.mxu0 0.0
    %224 = vmatprep.subr.mxu0 0.0
    %225 = vmatpush1.msra.mxu0 0.0
    %226 = vmatprep.subr.mxu0 0.0
    %227 = vmatpush1.msra.mxu0 0.0
    %228 = vmatprep.subr.mxu0 0.0
    %229 = vmatpush1.msra.mxu0 0.0
    %230 = vmatprep.subr.mxu0 0.0
    %231 = vmatpush1.msra.mxu0 0.0
    %232 = vmatprep.subr.mxu0 0.0
    %233 = vmatpush1.msra.mxu0 0.0
    %234 = vmatprep.subr.mxu0 0.0
    %235 = vmatpush1.msra.mxu0 0.0
    %236 = vmatprep.subr.mxu0 0.0
    %237 = vmatpush1.msra.mxu0 0.0
    %238 = vmatprep.subr.mxu0 0.0
    %239 = vmatpush1.msra.mxu0 0.0
    %240 = vmatprep.subr.mxu0 0.0
    %241 = vmatpush1.msra.mxu0 0.0
    %242 = vmatprep.subr.mxu0 0.0
    %243 = vmatpush1.msra.mxu0 0.0
    %244 = vmatprep.subr.mxu0 0.0
    %245 = vmatpush1.msra.mxu0 0.0
    %246 = vmatprep.subr.mxu0 0.0
    %247 = vmatpush1.msra.mxu0 0.0
    %248 = vmatprep.subr.mxu0 0.0
    %249 = vmatpush1.msra.mxu0 0.0
    %250 = vmatprep.subr.mxu0 0.0
    %251 = vmatpush1.msra.mxu0 0.0
    %252 = vmatprep.subr.mxu0 0.0
    %253 = vmatpush1.msra.mxu0 0.0
    %254 = vmatprep.subr.mxu0 0.0
    %255 = vmatpush1.msra.mxu0 0.0
    %256 = vmatprep.subr.mxu0 0.0
    %257 = vmatpush1.msra.mxu0 0.0
    %258 = vmatprep.subr.mxu0 0.0
    %259 = vmatpush1.msra.mxu0 0.0
    %260 = vmatprep.subr.mxu0 0.0
    %261 = vmatpush1.msra.mxu0 0.0
    %262 = vmatprep.subr.mxu0 0.0
    %263 = vmatpush1.msra.mxu0 0.0
    %264 = vmatprep.subr.mxu0 0.0
    %265 = vmatpush1.msra.mxu0 0.0
    %266 = vmatprep.subr.mxu0 0.0
    %267 = vmatpush1.msra.mxu0 0.0
    %268 = vmatprep.subr.mxu0 0.0
    %269 = vmatpush1.msra.mxu0 0.0
    %270 = vmatprep.mubr.f32.mxu0 0.0
    %271 = vmatmul.mubr.f32.gmra.mrb[0].mxu0 %v201
    %v272 = vpop.f32.mrb[0].mxu0
    %v273 = vadd.f32 %v182, %v272
    %v274 = vpop.f32.mrb[0].mxu0
    %v275 = vadd.f32 %v186, %v274
    %276 = vmatprep.mubr.f32.mxu0 0.0
    %277 = vmatmul.mubr.f32.gmra.mrb[0].mxu0 %v204
    %v278 = vpop.f32.mrb[0].mxu0
    %v279 = vadd.f32 %v182, %v278
    %v280 = vpop.f32.mrb[0].mxu0
    %v281 = vadd.f32 %v186, %v280
    %282 = vdwg.mxu0
    %283 = vmatprep.subr.mxu0 %v148
    %284 = vmatpush1.msra.mxu0 %v147
    %285 = vmatprep.subr.mxu0 %v152
    %286 = vmatpush1.msra.mxu0 %v151
    %287 = vmatprep.subr.mxu0 %v156
    %288 = vmatpush1.msra.mxu0 %v155
    %289 = vmatprep.subr.mxu0 %v160
    %290 = vmatpush1.msra.mxu0 %v159
    %291 = vmatprep.subr.mxu0 %v164
    %292 = vmatpush1.msra.mxu0 %v163
    %293 = vmatprep.subr.mxu0 %v168
    %294 = vmatpush1.msra.mxu0 %v167
    %295 = vmatprep.subr.mxu0 %v172
    %296 = vmatpush1.msra.mxu0 %v171
    %297 = vmatprep.subr.mxu0 %v176
    %298 = vmatpush1.msra.mxu0 %v175
    %299 = vmatprep.subr.mxu0 0.0
    %300 = vmatpush1.msra.mxu0 0.0
    %301 = vmatprep.subr.mxu0 0.0
    %302 = vmatpush1.msra.mxu0 0.0
    %303 = vmatprep.subr.mxu0 0.0
    %304 = vmatpush1.msra.mxu0 0.0
    %305 = vmatprep.subr.mxu0 0.0
    %306 = vmatpush1.msra.mxu0 0.0
    %307 = vmatprep.subr.mxu0 0.0
    %308 = vmatpush1.msra.mxu0 0.0
    %309 = vmatprep.subr.mxu0 0.0
    %310 = vmatpush1.msra.mxu0 0.0
    %311 = vmatprep.subr.mxu0 0.0
    %312 = vmatpush1.msra.mxu0 0.0
    %313 = vmatprep.subr.mxu0 0.0
    %314 = vmatpush1.msra.mxu0 0.0
    %315 = vmatprep.subr.mxu0 0.0
    %316 = vmatpush1.msra.mxu0 0.0
    %317 = vmatprep.subr.mxu0 0.0
    %318 = vmatpush1.msra.mxu0 0.0
    %319 = vmatprep.subr.mxu0 0.0
    %320 = vmatpush1.msra.mxu0 0.0
    %321 = vmatprep.subr.mxu0 0.0
    %322 = vmatpush1.msra.mxu0 0.0
    %323 = vmatprep.subr.mxu0 0.0
    %324 = vmatpush1.msra.mxu0 0.0
    %325 = vmatprep.subr.mxu0 0.0
    %326 = vmatpush1.msra.mxu0 0.0
    %327 = vmatprep.subr.mxu0 0.0
    %328 = vmatpush1.msra.mxu0 0.0
    %329 = vmatprep.subr.mxu0 0.0
    %330 = vmatpush1.msra.mxu0 0.0
    %331 = vmatprep.subr.mxu0 0.0
    %332 = vmatpush1.msra.mxu0 0.0
    %333 = vmatprep.subr.mxu0 0.0
    %334 = vmatpush1.msra.mxu0 0.0
    %335 = vmatprep.subr.mxu0 0.0
    %336 = vmatpush1.msra.mxu0 0.0
    %337 = vmatprep.subr.mxu0 0.0
    %338 = vmatpush1.msra.mxu0 0.0
    %339 = vmatprep.subr.mxu0 0.0
    %340 = vmatpush1.msra.mxu0 0.0
    %341 = vmatprep.subr.mxu0 0.0
    %342 = vmatpush1.msra.mxu0 0.0
    %343 = vmatprep.subr.mxu0 0.0
    %344 = vmatpush1.msra.mxu0 0.0
    %345 = vmatprep.subr.mxu0 0.0
    %346 = vmatpush1.msra.mxu0 0.0
    %347 = vmatprep.mubr.f32.mxu0 0.0
    %348 = vmatmul.mubr.f32.gmra.mrb[0].mxu0 %v201
    %v349 = vpop.f32.mrb[0].mxu0
    %v350 = vadd.f32 %v190, %v349
    %v351 = vpop.f32.mrb[0].mxu0
    %v352 = vadd.f32 %v194, %v351
    %353 = vmatprep.mubr.f32.mxu0 0.0
    %354 = vmatmul.mubr.f32.gmra.mrb[0].mxu0 %v204
    %v355 = vpop.f32.mrb[0].mxu0
    %v356 = vadd.f32 %v190, %v355
    %v357 = vpop.f32.mrb[0].mxu0
    %v358 = vadd.f32 %v194, %v357
    %359 = vdwg.mxu0
    %v360 = vld [vmem:[#allocation7] sm:$0xff]
    %v361 = vld [vmem:[#allocation7 + $0x8] sm:$0xff]
    %vm362 = vcmask 130048
    %v364 = vsel %vm362, %v360, 0
    %v367 = vsel %vm362, %v361, 0
    %369 = vmatprep.subr.mxu0 %v352
    %370 = vmatpush1.msra.mxu0 %v350
    %371 = vmatprep.subr.mxu0 %v358
    %372 = vmatpush1.msra.mxu0 %v356
    %373 = vmatprep.subr.mxu0 0.0
    %374 = vmatpush1.msra.mxu0 0.0
    %375 = vmatprep.subr.mxu0 0.0
    %376 = vmatpush1.msra.mxu0 0.0
    %377 = vmatprep.subr.mxu0 0.0
    %378 = vmatpush1.msra.mxu0 0.0
    %379 = vmatprep.subr.mxu0 0.0
    %380 = vmatpush1.msra.mxu0 0.0
    %381 = vmatprep.subr.mxu0 0.0
    %382 = vmatpush1.msra.mxu0 0.0
    %383 = vmatprep.subr.mxu0 0.0
    %384 = vmatpush1.msra.mxu0 0.0
    %385 = vmatprep.subr.mxu0 0.0
    %386 = vmatpush1.msra.mxu0 0.0
    %387 = vmatprep.subr.mxu0 0.0
    %388 = vmatpush1.msra.mxu0 0.0
    %389 = vmatprep.subr.mxu0 0.0
    %390 = vmatpush1.msra.mxu0 0.0
    %391 = vmatprep.subr.mxu0 0.0
    %392 = vmatpush1.msra.mxu0 0.0
    %393 = vmatprep.subr.mxu0 0.0
    %394 = vmatpush1.msra.mxu0 0.0
    %395 = vmatprep.subr.mxu0 0.0
    %396 = vmatpush1.msra.mxu0 0.0
    %397 = vmatprep.subr.mxu0 0.0
    %398 = vmatpush1.msra.mxu0 0.0
    %399 = vmatprep.subr.mxu0 0.0
    %400 = vmatpush1.msra.mxu0 0.0
    %401 = vmatprep.subr.mxu0 0.0
    %402 = vmatpush1.msra.mxu0 0.0
    %403 = vmatprep.subr.mxu0 0.0
    %404 = vmatpush1.msra.mxu0 0.0
    %405 = vmatprep.subr.mxu0 0.0
    %406 = vmatpush1.msra.mxu0 0.0
    %407 = vmatprep.subr.mxu0 0.0
    %408 = vmatpush1.msra.mxu0 0.0
    %409 = vmatprep.subr.mxu0 0.0
    %410 = vmatpush1.msra.mxu0 0.0
    %411 = vmatprep.subr.mxu0 0.0
    %412 = vmatpush1.msra.mxu0 0.0
    %413 = vmatprep.subr.mxu0 0.0
    %414 = vmatpush1.msra.mxu0 0.0
    %415 = vmatprep.subr.mxu0 0.0
    %416 = vmatpush1.msra.mxu0 0.0
    %417 = vmatprep.subr.mxu0 0.0
    %418 = vmatpush1.msra.mxu0 0.0
    %419 = vmatprep.subr.mxu0 0.0
    %420 = vmatpush1.msra.mxu0 0.0
    %421 = vmatprep.subr.mxu0 0.0
    %422 = vmatpush1.msra.mxu0 0.0
    %423 = vmatprep.subr.mxu0 0.0
    %424 = vmatpush1.msra.mxu0 0.0
    %425 = vmatprep.subr.mxu0 0.0
    %426 = vmatpush1.msra.mxu0 0.0
    %427 = vmatprep.subr.mxu0 0.0
    %428 = vmatpush1.msra.mxu0 0.0
    %429 = vmatprep.subr.mxu0 0.0
    %430 = vmatpush1.msra.mxu0 0.0
    %431 = vmatprep.subr.mxu0 0.0
    %432 = vmatpush1.msra.mxu0 0.0
    %433 = vmatprep.mubr.f32.mxu0 0.0
    %434 = vmatmul.mubr.f32.gmra.mrb[0].mxu0 %v364
    %v435 = vpop.f32.mrb[0].mxu0
    %v436 = vadd.f32 0.0, %v435
    %v437 = vpop.f32.mrb[0].mxu0
    %v438 = vadd.f32 0.0, %v437
    %439 = vmatprep.mubr.f32.mxu0 0.0
    %440 = vmatmul.mubr.f32.gmra.mrb[0].mxu0 %v367
    %v441 = vpop.f32.mrb[0].mxu0
    %v442 = vadd.f32 0.0, %v441
    %v443 = vpop.f32.mrb[0].mxu0
    %v444 = vadd.f32 0.0, %v443
    %445 = vdwg.mxu0
    %v446 = vld [vmem:[#allocation8] sm:$0xff]
    %v447 = vld [vmem:[#allocation8 + $0x8] sm:$0xff]
    %v449 = vsel %vm362, %v446, 0
    %v452 = vsel %vm362, %v447, 0
    %454 = vmatprep.subr.mxu0 %v275
    %455 = vmatpush1.msra.mxu0 %v273
    %456 = vmatprep.subr.mxu0 %v281
    %457 = vmatpush1.msra.mxu0 %v279
    %458 = vmatprep.subr.mxu0 0.0
    %459 = vmatpush1.msra.mxu0 0.0
    %460 = vmatprep.subr.mxu0 0.0
    %461 = vmatpush1.msra.mxu0 0.0
    %462 = vmatprep.subr.mxu0 0.0
    %463 = vmatpush1.msra.mxu0 0.0
    %464 = vmatprep.subr.mxu0 0.0
    %465 = vmatpush1.msra.mxu0 0.0
    %466 = vmatprep.subr.mxu0 0.0
    %467 = vmatpush1.msra.mxu0 0.0
    %468 = vmatprep.subr.mxu0 0.0
    %469 = vmatpush1.msra.mxu0 0.0
    %470 = vmatprep.subr.mxu0 0.0
    %471 = vmatpush1.msra.mxu0 0.0
    %472 = vmatprep.subr.mxu0 0.0
    %473 = vmatpush1.msra.mxu0 0.0
    %474 = vmatprep.subr.mxu0 0.0
    %475 = vmatpush1.msra.mxu0 0.0
    %476 = vmatprep.subr.mxu0 0.0
    %477 = vmatpush1.msra.mxu0 0.0
    %478 = vmatprep.subr.mxu0 0.0
    %479 = vmatpush1.msra.mxu0 0.0
    %480 = vmatprep.subr.mxu0 0.0
    %481 = vmatpush1.msra.mxu0 0.0
    %482 = vmatprep.subr.mxu0 0.0
    %483 = vmatpush1.msra.mxu0 0.0
    %484 = vmatprep.subr.mxu0 0.0
    %485 = vmatpush1.msra.mxu0 0.0
    %486 = vmatprep.subr.mxu0 0.0
    %487 = vmatpush1.msra.mxu0 0.0
    %488 = vmatprep.subr.mxu0 0.0
    %489 = vmatpush1.msra.mxu0 0.0
    %490 = vmatprep.subr.mxu0 0.0
    %491 = vmatpush1.msra.mxu0 0.0
    %492 = vmatprep.subr.mxu0 0.0
    %493 = vmatpush1.msra.mxu0 0.0
    %494 = vmatprep.subr.mxu0 0.0
    %495 = vmatpush1.msra.mxu0 0.0
    %496 = vmatprep.subr.mxu0 0.0
    %497 = vmatpush1.msra.mxu0 0.0
    %498 = vmatprep.subr.mxu0 0.0
    %499 = vmatpush1.msra.mxu0 0.0
    %500 = vmatprep.subr.mxu0 0.0
    %501 = vmatpush1.msra.mxu0 0.0
    %502 = vmatprep.subr.mxu0 0.0
    %503 = vmatpush1.msra.mxu0 0.0
    %504 = vmatprep.subr.mxu0 0.0
    %505 = vmatpush1.msra.mxu0 0.0
    %506 = vmatprep.subr.mxu0 0.0
    %507 = vmatpush1.msra.mxu0 0.0
    %508 = vmatprep.subr.mxu0 0.0
    %509 = vmatpush1.msra.mxu0 0.0
    %510 = vmatprep.subr.mxu0 0.0
    %511 = vmatpush1.msra.mxu0 0.0
    %512 = vmatprep.subr.mxu0 0.0
    %513 = vmatpush1.msra.mxu0 0.0
    %514 = vmatprep.subr.mxu0 0.0
    %515 = vmatpush1.msra.mxu0 0.0
    %516 = vmatprep.subr.mxu0 0.0
    %517 = vmatpush1.msra.mxu0 0.0
    %518 = vmatprep.mubr.f32.mxu0 0.0
    %519 = vmatmul.mubr.f32.gmra.mrb[0].mxu0 %v449
    %v520 = vpop.f32.mrb[0].mxu0
    %v521 = vadd.f32 0.0, %v520
    %v522 = vpop.f32.mrb[0].mxu0
    %v523 = vadd.f32 0.0, %v522
    %524 = vmatprep.mubr.f32.mxu0 0.0
    %525 = vmatmul.mubr.f32.gmra.mrb[0].mxu0 %v452
    %v526 = vpop.f32.mrb[0].mxu0
    %v527 = vadd.f32 0.0, %v526
    %v528 = vpop.f32.mrb[0].mxu0
    %v529 = vadd.f32 0.0, %v528
    %530 = vdwg.mxu0
    %v531 = vld [vmem:[#allocation10] sm:$0xff]
    %v532 = vld [vmem:[#allocation10 + $0x8] sm:$0xff]
    %v533 = vld [vmem:[#allocation10 + $0x10] sm:$0xff]
    %v534 = vld [vmem:[#allocation10 + $0x18] sm:$0xff]
    %v535 = vld [vmem:[#allocation10 + $0x20] sm:$0xff]
    %v536 = vld [vmem:[#allocation10 + $0x28] sm:$0xff]
    %v537 = vld [vmem:[#allocation10 + $0x30] sm:$0xff]
    %v538 = vld [vmem:[#allocation10 + $0x38] sm:$0xff]
    %v539 = vld [vmem:[#allocation10 + $0x40] sm:$0xff]
    %v540 = vld [vmem:[#allocation10 + $0x48] sm:$0xff]
    %v541 = vld [vmem:[#allocation10 + $0x50] sm:$0xff]
    %v542 = vld [vmem:[#allocation10 + $0x58] sm:$0xff]
    %v543 = vld [vmem:[#allocation10 + $0x60] sm:$0xff]
    %v544 = vld [vmem:[#allocation10 + $0x68] sm:$0xff]
    %v545 = vld [vmem:[#allocation10 + $0x70] sm:$0xff]
    %v546 = vld [vmem:[#allocation10 + $0x78] sm:$0xff]
    %v547 = vld [vmem:[#allocation10 + $0x80] sm:$0xff]
    %v548 = vld [vmem:[#allocation10 + $0x88] sm:$0xff]
    %v549 = vld [vmem:[#allocation10 + $0x90] sm:$0xff]
    %v550 = vld [vmem:[#allocation10 + $0x98] sm:$0xff]
    %v551 = vld [vmem:[#allocation10 + $0xa0] sm:$0xff]
    %v552 = vld [vmem:[#allocation10 + $0xa8] sm:$0xff]
    %v553 = vld [vmem:[#allocation10 + $0xb0] sm:$0xff]
    %v554 = vld [vmem:[#allocation10 + $0xb8] sm:$0xff]
    %v555 = vld [vmem:[#allocation10 + $0xc0] sm:$0xff]
    %v556 = vld [vmem:[#allocation10 + $0xc8] sm:$0xff]
    %v557 = vld [vmem:[#allocation10 + $0xd0] sm:$0xff]
    %v558 = vld [vmem:[#allocation10 + $0xd8] sm:$0xff]
    %v559 = vld [vmem:[#allocation10 + $0xe0] sm:$0xff]
    %v560 = vld [vmem:[#allocation10 + $0xe8] sm:$0xff]
    %v561 = vld [vmem:[#allocation10 + $0xf0] sm:$0xff]
    %v562 = vld [vmem:[#allocation10 + $0xf8] sm:$0xff]
    %v563 = vld [vmem:[#allocation10 + $0x100] sm:$0xff]
    %v564 = vld [vmem:[#allocation10 + $0x108] sm:$0xff]
    %v565 = vld [vmem:[#allocation10 + $0x110] sm:$0xff]
    %v566 = vld [vmem:[#allocation10 + $0x118] sm:$0xff]
    %v567 = vld [vmem:[#allocation10 + $0x120] sm:$0xff]
    %v568 = vld [vmem:[#allocation10 + $0x128] sm:$0xff]
    %v569 = vld [vmem:[#allocation10 + $0x130] sm:$0xff]
    %v570 = vld [vmem:[#allocation10 + $0x138] sm:$0xff]
    %v571 = vld [vmem:[#allocation10 + $0x140] sm:$0xff]
    %v572 = vld [vmem:[#allocation10 + $0x148] sm:$0xff]
    %v573 = vld [vmem:[#allocation10 + $0x150] sm:$0xff]
    %v574 = vld [vmem:[#allocation10 + $0x158] sm:$0xff]
    %v575 = vld [vmem:[#allocation10 + $0x160] sm:$0xff]
    %v576 = vld [vmem:[#allocation10 + $0x168] sm:$0xff]
    %v577 = vld [vmem:[#allocation10 + $0x170] sm:$0xff]
    %v578 = vld [vmem:[#allocation10 + $0x178] sm:$0xff]
    %v579 = vld [vmem:[#allocation10 + $0x180] sm:$0xff]
    %v580 = vld [vmem:[#allocation10 + $0x188] sm:$0xff]
    %v581 = vld [vmem:[#allocation10 + $0x190] sm:$0xff]
    %v582 = vld [vmem:[#allocation10 + $0x198] sm:$0xff]
    %v583 = vld [vmem:[#allocation10 + $0x1a0] sm:$0xff]
    %v584 = vld [vmem:[#allocation10 + $0x1a8] sm:$0xff]
    %v585 = vld [vmem:[#allocation10 + $0x1b0] sm:$0xff]
    %v586 = vld [vmem:[#allocation10 + $0x1b8] sm:$0xff]
    %v587 = vld [vmem:[#allocation10 + $0x1c0] sm:$0xff]
    %v588 = vld [vmem:[#allocation10 + $0x1c8] sm:$0xff]
    %v589 = vld [vmem:[#allocation10 + $0x1d0] sm:$0xff]
    %v590 = vld [vmem:[#allocation10 + $0x1d8] sm:$0xff]
    %v591 = vld [vmem:[#allocation10 + $0x1e0] sm:$0xff]
    %v592 = vld [vmem:[#allocation10 + $0x1e8] sm:$0xff]
    %v593 = vld [vmem:[#allocation10 + $0x1f0] sm:$0xff]
    %v594 = vld [vmem:[#allocation10 + $0x1f8] sm:$0xff]
    %s595 = scalar_lea.vmem [#allocation10], 512
    %v596 = vld [vmem:[%s595] sm:$0xff]
    %v597 = vld [vmem:[%s595 + $0x8] sm:$0xff]
    %v598 = vld [vmem:[%s595 + $0x10] sm:$0xff]
    %v599 = vld [vmem:[%s595 + $0x18] sm:$0xff]
    %v600 = vld [vmem:[%s595 + $0x20] sm:$0xff]
    %v601 = vld [vmem:[%s595 + $0x28] sm:$0xff]
    %v602 = vld [vmem:[%s595 + $0x30] sm:$0xff]
    %v603 = vld [vmem:[%s595 + $0x38] sm:$0xff]
    %v604 = vld [vmem:[%s595 + $0x40] sm:$0xff]
    %v605 = vld [vmem:[%s595 + $0x48] sm:$0xff]
    %v606 = vld [vmem:[%s595 + $0x50] sm:$0xff]
    %v607 = vld [vmem:[%s595 + $0x58] sm:$0xff]
    %v608 = vld [vmem:[%s595 + $0x60] sm:$0xff]
    %v609 = vld [vmem:[%s595 + $0x68] sm:$0xff]
    %v610 = vld [vmem:[%s595 + $0x70] sm:$0xff]
    %v611 = vld [vmem:[%s595 + $0x78] sm:$0xff]
    %v612 = vld [vmem:[%s595 + $0x80] sm:$0xff]
    %v613 = vld [vmem:[%s595 + $0x88] sm:$0xff]
    %v614 = vld [vmem:[%s595 + $0x90] sm:$0xff]
    %v615 = vld [vmem:[%s595 + $0x98] sm:$0xff]
    %v616 = vld [vmem:[%s595 + $0xa0] sm:$0xff]
    %v617 = vld [vmem:[%s595 + $0xa8] sm:$0xff]
    %v618 = vld [vmem:[%s595 + $0xb0] sm:$0xff]
    %v619 = vld [vmem:[%s595 + $0xb8] sm:$0xff]
    %v620 = vld [vmem:[%s595 + $0xc0] sm:$0xff]
    %v621 = vld [vmem:[%s595 + $0xc8] sm:$0xff]
    %v622 = vld [vmem:[%s595 + $0xd0] sm:$0xff]
    %v623 = vld [vmem:[%s595 + $0xd8] sm:$0xff]
    %v624 = vld [vmem:[%s595 + $0xe0] sm:$0xff]
    %v625 = vld [vmem:[%s595 + $0xe8] sm:$0xff]
    %v626 = vld [vmem:[%s595 + $0xf0] sm:$0xff]
    %v627 = vld [vmem:[%s595 + $0xf8] sm:$0xff]
    %v628 = vld [vmem:[%s595 + $0x100] sm:$0xff]
    %v629 = vld [vmem:[%s595 + $0x108] sm:$0xff]
    %v630 = vld [vmem:[%s595 + $0x110] sm:$0xff]
    %v631 = vld [vmem:[%s595 + $0x118] sm:$0xff]
    %v632 = vld [vmem:[%s595 + $0x120] sm:$0xff]
    %v633 = vld [vmem:[%s595 + $0x128] sm:$0xff]
    %v634 = vld [vmem:[%s595 + $0x130] sm:$0xff]
    %v635 = vld [vmem:[%s595 + $0x138] sm:$0xff]
    %v636 = vld [vmem:[%s595 + $0x140] sm:$0xff]
    %v637 = vld [vmem:[%s595 + $0x148] sm:$0xff]
    %v638 = vld [vmem:[%s595 + $0x150] sm:$0xff]
    %v639 = vld [vmem:[%s595 + $0x158] sm:$0xff]
    %v640 = vld [vmem:[%s595 + $0x160] sm:$0xff]
    %v641 = vld [vmem:[%s595 + $0x168] sm:$0xff]
    %v642 = vld [vmem:[%s595 + $0x170] sm:$0xff]
    %v643 = vld [vmem:[%s595 + $0x178] sm:$0xff]
    %v644 = vld [vmem:[%s595 + $0x180] sm:$0xff]
    %v645 = vld [vmem:[%s595 + $0x188] sm:$0xff]
    %v646 = vld [vmem:[%s595 + $0x190] sm:$0xff]
    %v647 = vld [vmem:[%s595 + $0x198] sm:$0xff]
    %v648 = vld [vmem:[%s595 + $0x1a0] sm:$0xff]
    %v649 = vld [vmem:[%s595 + $0x1a8] sm:$0xff]
    %v650 = vld [vmem:[%s595 + $0x1b0] sm:$0xff]
    %v651 = vld [vmem:[%s595 + $0x1b8] sm:$0xff]
    %v652 = vld [vmem:[%s595 + $0x1c0] sm:$0xff]
    %v653 = vld [vmem:[%s595 + $0x1c8] sm:$0xff]
    %v654 = vld [vmem:[%s595 + $0x1d0] sm:$0xff]
    %v655 = vld [vmem:[%s595 + $0x1d8] sm:$0xff]
    %v656 = vld [vmem:[%s595 + $0x1e0] sm:$0xff]
    %v657 = vld [vmem:[%s595 + $0x1e8] sm:$0xff]
    %v658 = vld [vmem:[%s595 + $0x1f0] sm:$0xff]
    %v659 = vld [vmem:[%s595 + $0x1f8] sm:$0xff]
    %s660 = scalar_lea.vmem [#allocation10], 1024
    %v661 = vld [vmem:[%s660] sm:$0xff]
    %v662 = vld [vmem:[%s660 + $0x8] sm:$0xff]
    %v663 = vld [vmem:[%s660 + $0x10] sm:$0xff]
    %v664 = vld [vmem:[%s660 + $0x18] sm:$0xff]
    %v665 = vld [vmem:[%s660 + $0x20] sm:$0xff]
    %v666 = vld [vmem:[%s660 + $0x28] sm:$0xff]
    %v667 = vld [vmem:[%s660 + $0x30] sm:$0xff]
    %v668 = vld [vmem:[%s660 + $0x38] sm:$0xff]
    %v669 = vld [vmem:[%s660 + $0x40] sm:$0xff]
    %v670 = vld [vmem:[%s660 + $0x48] sm:$0xff]
    %v671 = vld [vmem:[%s660 + $0x50] sm:$0xff]
    %v672 = vld [vmem:[%s660 + $0x58] sm:$0xff]
    %v673 = vld [vmem:[%s660 + $0x60] sm:$0xff]
    %v674 = vld [vmem:[%s660 + $0x68] sm:$0xff]
    %v675 = vld [vmem:[%s660 + $0x70] sm:$0xff]
    %v676 = vld [vmem:[%s660 + $0x78] sm:$0xff]
    %v677 = vld [vmem:[%s660 + $0x80] sm:$0xff]
    %v678 = vld [vmem:[%s660 + $0x88] sm:$0xff]
    %v679 = vld [vmem:[%s660 + $0x90] sm:$0xff]
    %v680 = vld [vmem:[%s660 + $0x98] sm:$0xff]
    %v681 = vld [vmem:[%s660 + $0xa0] sm:$0xff]
    %v682 = vld [vmem:[%s660 + $0xa8] sm:$0xff]
    %v683 = vld [vmem:[%s660 + $0xb0] sm:$0xff]
    %v684 = vld [vmem:[%s660 + $0xb8] sm:$0xff]
    %v685 = vld [vmem:[%s660 + $0xc0] sm:$0xff]
    %v686 = vld [vmem:[%s660 + $0xc8] sm:$0xff]
    %v687 = vld [vmem:[%s660 + $0xd0] sm:$0xff]
    %v688 = vld [vmem:[%s660 + $0xd8] sm:$0xff]
    %v689 = vld [vmem:[%s660 + $0xe0] sm:$0xff]
    %v690 = vld [vmem:[%s660 + $0xe8] sm:$0xff]
    %v691 = vld [vmem:[%s660 + $0xf0] sm:$0xff]
    %v692 = vld [vmem:[%s660 + $0xf8] sm:$0xff]
    %v693 = vld [vmem:[%s660 + $0x100] sm:$0xff]
    %v694 = vld [vmem:[%s660 + $0x108] sm:$0xff]
    %v695 = vld [vmem:[%s660 + $0x110] sm:$0xff]
    %v696 = vld [vmem:[%s660 + $0x118] sm:$0xff]
    %v697 = vld [vmem:[%s660 + $0x120] sm:$0xff]
    %v698 = vld [vmem:[%s660 + $0x128] sm:$0xff]
    %v699 = vld [vmem:[%s660 + $0x130] sm:$0xff]
    %v700 = vld [vmem:[%s660 + $0x138] sm:$0xff]
    %v701 = vld [vmem:[%s660 + $0x140] sm:$0xff]
    %v702 = vld [vmem:[%s660 + $0x148] sm:$0xff]
    %v703 = vld [vmem:[%s660 + $0x150] sm:$0xff]
    %v704 = vld [vmem:[%s660 + $0x158] sm:$0xff]
    %v705 = vld [vmem:[%s660 + $0x160] sm:$0xff]
    %v706 = vld [vmem:[%s660 + $0x168] sm:$0xff]
    %v707 = vld [vmem:[%s660 + $0x170] sm:$0xff]
    %v708 = vld [vmem:[%s660 + $0x178] sm:$0xff]
    %v709 = vld [vmem:[%s660 + $0x180] sm:$0xff]
    %v710 = vld [vmem:[%s660 + $0x188] sm:$0xff]
    %v711 = vld [vmem:[%s660 + $0x190] sm:$0xff]
    %v712 = vld [vmem:[%s660 + $0x198] sm:$0xff]
    %v713 = vld [vmem:[%s660 + $0x1a0] sm:$0xff]
    %v714 = vld [vmem:[%s660 + $0x1a8] sm:$0xff]
    %v715 = vld [vmem:[%s660 + $0x1b0] sm:$0xff]
    %v716 = vld [vmem:[%s660 + $0x1b8] sm:$0xff]
    %v717 = vld [vmem:[%s660 + $0x1c0] sm:$0xff]
    %v718 = vld [vmem:[%s660 + $0x1c8] sm:$0xff]
    %v719 = vld [vmem:[%s660 + $0x1d0] sm:$0xff]
    %v720 = vld [vmem:[%s660 + $0x1d8] sm:$0xff]
    %v721 = vld [vmem:[%s660 + $0x1e0] sm:$0xff]
    %v722 = vld [vmem:[%s660 + $0x1e8] sm:$0xff]
    %v723 = vld [vmem:[%s660 + $0x1f0] sm:$0xff]
    %v724 = vld [vmem:[%s660 + $0x1f8] sm:$0xff]
    %725 = vmatprep.subr.mxu0 %v597
    %726 = vmatpush1.msra.mxu0 %v596
    %727 = vmatprep.subr.mxu0 %v599
    %728 = vmatpush1.msra.mxu0 %v598
    %729 = vmatprep.subr.mxu0 %v601
    %730 = vmatpush1.msra.mxu0 %v600
    %731 = vmatprep.subr.mxu0 %v603
    %732 = vmatpush1.msra.mxu0 %v602
    %733 = vmatprep.subr.mxu0 %v605
    %734 = vmatpush1.msra.mxu0 %v604
    %735 = vmatprep.subr.mxu0 %v607
    %736 = vmatpush1.msra.mxu0 %v606
    %737 = vmatprep.subr.mxu0 %v609
    %738 = vmatpush1.msra.mxu0 %v608
    %739 = vmatprep.subr.mxu0 %v611
    %740 = vmatpush1.msra.mxu0 %v610
    %741 = vmatprep.subr.mxu0 %v613
    %742 = vmatpush1.msra.mxu0 %v612
    %743 = vmatprep.subr.mxu0 %v615
    %744 = vmatpush1.msra.mxu0 %v614
    %745 = vmatprep.subr.mxu0 %v617
    %746 = vmatpush1.msra.mxu0 %v616
    %747 = vmatprep.subr.mxu0 %v619
    %748 = vmatpush1.msra.mxu0 %v618
    %749 = vmatprep.subr.mxu0 %v621
    %750 = vmatpush1.msra.mxu0 %v620
    %751 = vmatprep.subr.mxu0 %v623
    %752 = vmatpush1.msra.mxu0 %v622
    %753 = vmatprep.subr.mxu0 %v625
    %754 = vmatpush1.msra.mxu0 %v624
    %755 = vmatprep.subr.mxu0 %v627
    %756 = vmatpush1.msra.mxu0 %v626
    %757 = vmatprep.subr.mxu0 %v629
    %758 = vmatpush1.msra.mxu0 %v628
    %759 = vmatprep.subr.mxu0 %v631
    %760 = vmatpush1.msra.mxu0 %v630
    %761 = vmatprep.subr.mxu0 %v633
    %762 = vmatpush1.msra.mxu0 %v632
    %763 = vmatprep.subr.mxu0 %v635
    %764 = vmatpush1.msra.mxu0 %v634
    %765 = vmatprep.subr.mxu0 %v637
    %766 = vmatpush1.msra.mxu0 %v636
    %767 = vmatprep.subr.mxu0 %v639
    %768 = vmatpush1.msra.mxu0 %v638
    %769 = vmatprep.subr.mxu0 %v641
    %770 = vmatpush1.msra.mxu0 %v640
    %771 = vmatprep.subr.mxu0 %v643
    %772 = vmatpush1.msra.mxu0 %v642
    %773 = vmatprep.subr.mxu0 %v645
    %774 = vmatpush1.msra.mxu0 %v644
    %775 = vmatprep.subr.mxu0 %v647
    %776 = vmatpush1.msra.mxu0 %v646
    %777 = vmatprep.subr.mxu0 %v649
    %778 = vmatpush1.msra.mxu0 %v648
    %779 = vmatprep.subr.mxu0 %v651
    %780 = vmatpush1.msra.mxu0 %v650
    %781 = vmatprep.subr.mxu0 %v653
    %782 = vmatpush1.msra.mxu0 %v652
    %783 = vmatprep.subr.mxu0 %v655
    %784 = vmatpush1.msra.mxu0 %v654
    %785 = vmatprep.subr.mxu0 %v657
    %786 = vmatpush1.msra.mxu0 %v656
    %787 = vmatprep.subr.mxu0 %v659
    %788 = vmatpush1.msra.mxu0 %v658
    %789 = vmatprep.mubr.f32.mxu0 %v275
    %790 = vmatmul.mubr.f32.gmra.mrb[0].mxu0 %v273
    %v791 = vpop.f32.mrb[0].mxu0
    %v792 = vadd.f32 0.0, %v791
    %v793 = vpop.f32.mrb[0].mxu0
    %v794 = vadd.f32 0.0, %v793
    %795 = vmatprep.mubr.f32.mxu0 %v281
    %796 = vmatmul.mubr.f32.gmra.mrb[0].mxu0 %v279
    %v797 = vpop.f32.mrb[0].mxu0
    %v798 = vadd.f32 0.0, %v797
    %v799 = vpop.f32.mrb[0].mxu0
    %v800 = vadd.f32 0.0, %v799
    %801 = vdwg.mxu0
    %802 = vmatprep.subr.mxu0 %v532
    %803 = vmatpush1.msra.mxu0 %v531
    %804 = vmatprep.subr.mxu0 %v534
    %805 = vmatpush1.msra.mxu0 %v533
    %806 = vmatprep.subr.mxu0 %v536
    %807 = vmatpush1.msra.mxu0 %v535
    %808 = vmatprep.subr.mxu0 %v538
    %809 = vmatpush1.msra.mxu0 %v537
    %810 = vmatprep.subr.mxu0 %v540
    %811 = vmatpush1.msra.mxu0 %v539
    %812 = vmatprep.subr.mxu0 %v542
    %813 = vmatpush1.msra.mxu0 %v541
    %814 = vmatprep.subr.mxu0 %v544
    %815 = vmatpush1.msra.mxu0 %v543
    %816 = vmatprep.subr.mxu0 %v546
    %817 = vmatpush1.msra.mxu0 %v545
    %818 = vmatprep.subr.mxu0 %v548
    %819 = vmatpush1.msra.mxu0 %v547
    %820 = vmatprep.subr.mxu0 %v550
    %821 = vmatpush1.msra.mxu0 %v549
    %822 = vmatprep.subr.mxu0 %v552
    %823 = vmatpush1.msra.mxu0 %v551
    %824 = vmatprep.subr.mxu0 %v554
    %825 = vmatpush1.msra.mxu0 %v553
    %826 = vmatprep.subr.mxu0 %v556
    %827 = vmatpush1.msra.mxu0 %v555
    %828 = vmatprep.subr.mxu0 %v558
    %829 = vmatpush1.msra.mxu0 %v557
    %830 = vmatprep.subr.mxu0 %v560
    %831 = vmatpush1.msra.mxu0 %v559
    %832 = vmatprep.subr.mxu0 %v562
    %833 = vmatpush1.msra.mxu0 %v561
    %834 = vmatprep.subr.mxu0 %v564
    %835 = vmatpush1.msra.mxu0 %v563
    %836 = vmatprep.subr.mxu0 %v566
    %837 = vmatpush1.msra.mxu0 %v565
    %838 = vmatprep.subr.mxu0 %v568
    %839 = vmatpush1.msra.mxu0 %v567
    %840 = vmatprep.subr.mxu0 %v570
    %841 = vmatpush1.msra.mxu0 %v569
    %842 = vmatprep.subr.mxu0 %v572
    %843 = vmatpush1.msra.mxu0 %v571
    %844 = vmatprep.subr.mxu0 %v574
    %845 = vmatpush1.msra.mxu0 %v573
    %846 = vmatprep.subr.mxu0 %v576
    %847 = vmatpush1.msra.mxu0 %v575
    %848 = vmatprep.subr.mxu0 %v578
    %849 = vmatpush1.msra.mxu0 %v577
    %850 = vmatprep.subr.mxu0 %v580
    %851 = vmatpush1.msra.mxu0 %v579
    %852 = vmatprep.subr.mxu0 %v582
    %853 = vmatpush1.msra.mxu0 %v581
    %854 = vmatprep.subr.mxu0 %v584
    %855 = vmatpush1.msra.mxu0 %v583
    %856 = vmatprep.subr.mxu0 %v586
    %857 = vmatpush1.msra.mxu0 %v585
    %858 = vmatprep.subr.mxu0 %v588
    %859 = vmatpush1.msra.mxu0 %v587
    %860 = vmatprep.subr.mxu0 %v590
    %861 = vmatpush1.msra.mxu0 %v589
    %862 = vmatprep.subr.mxu0 %v592
    %863 = vmatpush1.msra.mxu0 %v591
    %864 = vmatprep.subr.mxu0 %v594
    %865 = vmatpush1.msra.mxu0 %v593
    %866 = vmatprep.mubr.f32.mxu0 %v438
    %867 = vmatmul.mubr.f32.gmra.mrb[0].mxu0 %v436
    %v868 = vpop.f32.mrb[0].mxu0
    %v869 = vadd.f32 %v792, %v868
    %v870 = vpop.f32.mrb[0].mxu0
    %v871 = vadd.f32 %v794, %v870
    %872 = vmatprep.mubr.f32.mxu0 %v444
    %873 = vmatmul.mubr.f32.gmra.mrb[0].mxu0 %v442
    %v874 = vpop.f32.mrb[0].mxu0
    %v875 = vadd.f32 %v798, %v874
    %v876 = vpop.f32.mrb[0].mxu0
    %v877 = vadd.f32 %v800, %v876
    %878 = vdwg.mxu0
    %879 = vmatprep.subr.mxu0 %v662
    %880 = vmatpush1.msra.mxu0 %v661
    %881 = vmatprep.subr.mxu0 %v664
    %882 = vmatpush1.msra.mxu0 %v663
    %883 = vmatprep.subr.mxu0 %v666
    %884 = vmatpush1.msra.mxu0 %v665
    %885 = vmatprep.subr.mxu0 %v668
    %886 = vmatpush1.msra.mxu0 %v667
    %887 = vmatprep.subr.mxu0 %v670
    %888 = vmatpush1.msra.mxu0 %v669
    %889 = vmatprep.subr.mxu0 %v672
    %890 = vmatpush1.msra.mxu0 %v671
    %891 = vmatprep.subr.mxu0 %v674
    %892 = vmatpush1.msra.mxu0 %v673
    %893 = vmatprep.subr.mxu0 %v676
    %894 = vmatpush1.msra.mxu0 %v675
    %895 = vmatprep.subr.mxu0 %v678
    %896 = vmatpush1.msra.mxu0 %v677
    %897 = vmatprep.subr.mxu0 %v680
    %898 = vmatpush1.msra.mxu0 %v679
    %899 = vmatprep.subr.mxu0 %v682
    %900 = vmatpush1.msra.mxu0 %v681
    %901 = vmatprep.subr.mxu0 %v684
    %902 = vmatpush1.msra.mxu0 %v683
    %903 = vmatprep.subr.mxu0 %v686
    %904 = vmatpush1.msra.mxu0 %v685
    %905 = vmatprep.subr.mxu0 %v688
    %906 = vmatpush1.msra.mxu0 %v687
    %907 = vmatprep.subr.mxu0 %v690
    %908 = vmatpush1.msra.mxu0 %v689
    %909 = vmatprep.subr.mxu0 %v692
    %910 = vmatpush1.msra.mxu0 %v691
    %911 = vmatprep.subr.mxu0 %v694
    %912 = vmatpush1.msra.mxu0 %v693
    %913 = vmatprep.subr.mxu0 %v696
    %914 = vmatpush1.msra.mxu0 %v695
    %915 = vmatprep.subr.mxu0 %v698
    %916 = vmatpush1.msra.mxu0 %v697
    %917 = vmatprep.subr.mxu0 %v700
    %918 = vmatpush1.msra.mxu0 %v699
    %919 = vmatprep.subr.mxu0 %v702
    %920 = vmatpush1.msra.mxu0 %v701
    %921 = vmatprep.subr.mxu0 %v704
    %922 = vmatpush1.msra.mxu0 %v703
    %923 = vmatprep.subr.mxu0 %v706
    %924 = vmatpush1.msra.mxu0 %v705
    %925 = vmatprep.subr.mxu0 %v708
    %926 = vmatpush1.msra.mxu0 %v707
    %927 = vmatprep.subr.mxu0 %v710
    %928 = vmatpush1.msra.mxu0 %v709
    %929 = vmatprep.subr.mxu0 %v712
    %930 = vmatpush1.msra.mxu0 %v711
    %931 = vmatprep.subr.mxu0 %v714
    %932 = vmatpush1.msra.mxu0 %v713
    %933 = vmatprep.subr.mxu0 %v716
    %934 = vmatpush1.msra.mxu0 %v715
    %935 = vmatprep.subr.mxu0 %v718
    %936 = vmatpush1.msra.mxu0 %v717
    %937 = vmatprep.subr.mxu0 %v720
    %938 = vmatpush1.msra.mxu0 %v719
    %939 = vmatprep.subr.mxu0 %v722
    %940 = vmatpush1.msra.mxu0 %v721
    %941 = vmatprep.subr.mxu0 %v724
    %942 = vmatpush1.msra.mxu0 %v723
    %943 = vmatprep.mubr.f32.mxu0 %v352
    %944 = vmatmul.mubr.f32.gmra.mrb[0].mxu0 %v350
    %v945 = vpop.f32.mrb[0].mxu0
    %v946 = vadd.f32 0.0, %v945
    %v947 = vpop.f32.mrb[0].mxu0
    %v948 = vadd.f32 0.0, %v947
    %949 = vmatprep.mubr.f32.mxu0 %v358
    %950 = vmatmul.mubr.f32.gmra.mrb[0].mxu0 %v356
    %v951 = vpop.f32.mrb[0].mxu0
    %v952 = vadd.f32 0.0, %v951
    %v953 = vpop.f32.mrb[0].mxu0
    %v954 = vadd.f32 0.0, %v953
    %955 = vdwg.mxu0
    %v956 = vadd.f32 %v869, %v946
    %v957 = vadd.f32 %v871, %v948
    %v958 = vadd.f32 %v875, %v952
    %v959 = vadd.f32 %v877, %v954
    %v960 = vld [vmem:[%s6] sm:$0x3]
    %v962 = vlaneseq
    %v963 = vshrl.u32 %v962, 7
    %v964 = vsub.s32 0, %v963
    %v965 = vrot.slane %v960, %v964
    %v966 = vlaneseq
    %v967 = vshrl.u32 %v966, 7
    %v968 = vsub.s32 1, %v967
    %v969 = vrot.slane %v960, %v968
    %v972 = vadd.f32 %v956, %v965
    %v973 = vadd.f32 %v957, %v969
    %v974 = vadd.f32 %v958, %v965
    %v975 = vadd.f32 %v959, %v969
    %976 = vmatprep.subr.mxu0 %v597
    %977 = vmatpush1.msra.mxu0 %v596
    %978 = vmatprep.subr.mxu0 %v599
    %979 = vmatpush1.msra.mxu0 %v598
    %980 = vmatprep.subr.mxu0 %v601
    %981 = vmatpush1.msra.mxu0 %v600
    %982 = vmatprep.subr.mxu0 %v603
    %983 = vmatpush1.msra.mxu0 %v602
    %984 = vmatprep.subr.mxu0 %v605
    %985 = vmatpush1.msra.mxu0 %v604
    %986 = vmatprep.subr.mxu0 %v607
    %987 = vmatpush1.msra.mxu0 %v606
    %988 = vmatprep.subr.mxu0 %v609
    %989 = vmatpush1.msra.mxu0 %v608
    %990 = vmatprep.subr.mxu0 %v611
    %991 = vmatpush1.msra.mxu0 %v610
    %992 = vmatprep.subr.mxu0 %v613
    %993 = vmatpush1.msra.mxu0 %v612
    %994 = vmatprep.subr.mxu0 %v615
    %995 = vmatpush1.msra.mxu0 %v614
    %996 = vmatprep.subr.mxu0 %v617
    %997 = vmatpush1.msra.mxu0 %v616
    %998 = vmatprep.subr.mxu0 %v619
    %999 = vmatpush1.msra.mxu0 %v618
    %1000 = vmatprep.subr.mxu0 %v621
    %1001 = vmatpush1.msra.mxu0 %v620
    %1002 = vmatprep.subr.mxu0 %v623
    %1003 = vmatpush1.msra.mxu0 %v622
    %1004 = vmatprep.subr.mxu0 %v625
    %1005 = vmatpush1.msra.mxu0 %v624
    %1006 = vmatprep.subr.mxu0 %v627
    %1007 = vmatpush1.msra.mxu0 %v626
    %1008 = vmatprep.subr.mxu0 %v629
    %1009 = vmatpush1.msra.mxu0 %v628
    %1010 = vmatprep.subr.mxu0 %v631
    %1011 = vmatpush1.msra.mxu0 %v630
    %1012 = vmatprep.subr.mxu0 %v633
    %1013 = vmatpush1.msra.mxu0 %v632
    %1014 = vmatprep.subr.mxu0 %v635
    %1015 = vmatpush1.msra.mxu0 %v634
    %1016 = vmatprep.subr.mxu0 %v637
    %1017 = vmatpush1.msra.mxu0 %v636
    %1018 = vmatprep.subr.mxu0 %v639
    %1019 = vmatpush1.msra.mxu0 %v638
    %1020 = vmatprep.subr.mxu0 %v641
    %1021 = vmatpush1.msra.mxu0 %v640
    %1022 = vmatprep.subr.mxu0 %v643
    %1023 = vmatpush1.msra.mxu0 %v642
    %1024 = vmatprep.subr.mxu0 %v645
    %1025 = vmatpush1.msra.mxu0 %v644
    %1026 = vmatprep.subr.mxu0 %v647
    %1027 = vmatpush1.msra.mxu0 %v646
    %1028 = vmatprep.subr.mxu0 %v649
    %1029 = vmatpush1.msra.mxu0 %v648
    %1030 = vmatprep.subr.mxu0 %v651
    %1031 = vmatpush1.msra.mxu0 %v650
    %1032 = vmatprep.subr.mxu0 %v653
    %1033 = vmatpush1.msra.mxu0 %v652
    %1034 = vmatprep.subr.mxu0 %v655
    %1035 = vmatpush1.msra.mxu0 %v654
    %1036 = vmatprep.subr.mxu0 %v657
    %1037 = vmatpush1.msra.mxu0 %v656
    %1038 = vmatprep.subr.mxu0 %v659
    %1039 = vmatpush1.msra.mxu0 %v658
    %1040 = vmatprep.mubr.f32.mxu0 %v352
    %1041 = vmatmul.mubr.f32.gmra.mrb[0].mxu0 %v350
    %v1042 = vpop.f32.mrb[0].mxu0
    %v1043 = vadd.f32 0.0, %v1042
    %v1044 = vpop.f32.mrb[0].mxu0
    %v1045 = vadd.f32 0.0, %v1044
    %1046 = vmatprep.mubr.f32.mxu0 %v358
    %1047 = vmatmul.mubr.f32.gmra.mrb[0].mxu0 %v356
    %v1048 = vpop.f32.mrb[0].mxu0
    %v1049 = vadd.f32 0.0, %v1048
    %v1050 = vpop.f32.mrb[0].mxu0
    %v1051 = vadd.f32 0.0, %v1050
    %1052 = vdwg.mxu0
    %1053 = vmatprep.subr.mxu0 %v532
    %1054 = vmatpush1.msra.mxu0 %v531
    %1055 = vmatprep.subr.mxu0 %v534
    %1056 = vmatpush1.msra.mxu0 %v533
    %1057 = vmatprep.subr.mxu0 %v536
    %1058 = vmatpush1.msra.mxu0 %v535
    %1059 = vmatprep.subr.mxu0 %v538
    %1060 = vmatpush1.msra.mxu0 %v537
    %1061 = vmatprep.subr.mxu0 %v540
    %1062 = vmatpush1.msra.mxu0 %v539
    %1063 = vmatprep.subr.mxu0 %v542
    %1064 = vmatpush1.msra.mxu0 %v541
    %1065 = vmatprep.subr.mxu0 %v544
    %1066 = vmatpush1.msra.mxu0 %v543
    %1067 = vmatprep.subr.mxu0 %v546
    %1068 = vmatpush1.msra.mxu0 %v545
    %1069 = vmatprep.subr.mxu0 %v548
    %1070 = vmatpush1.msra.mxu0 %v547
    %1071 = vmatprep.subr.mxu0 %v550
    %1072 = vmatpush1.msra.mxu0 %v549
    %1073 = vmatprep.subr.mxu0 %v552
    %1074 = vmatpush1.msra.mxu0 %v551
    %1075 = vmatprep.subr.mxu0 %v554
    %1076 = vmatpush1.msra.mxu0 %v553
    %1077 = vmatprep.subr.mxu0 %v556
    %1078 = vmatpush1.msra.mxu0 %v555
    %1079 = vmatprep.subr.mxu0 %v558
    %1080 = vmatpush1.msra.mxu0 %v557
    %1081 = vmatprep.subr.mxu0 %v560
    %1082 = vmatpush1.msra.mxu0 %v559
    %1083 = vmatprep.subr.mxu0 %v562
    %1084 = vmatpush1.msra.mxu0 %v561
    %1085 = vmatprep.subr.mxu0 %v564
    %1086 = vmatpush1.msra.mxu0 %v563
    %1087 = vmatprep.subr.mxu0 %v566
    %1088 = vmatpush1.msra.mxu0 %v565
    %1089 = vmatprep.subr.mxu0 %v568
    %1090 = vmatpush1.msra.mxu0 %v567
    %1091 = vmatprep.subr.mxu0 %v570
    %1092 = vmatpush1.msra.mxu0 %v569
    %1093 = vmatprep.subr.mxu0 %v572
    %1094 = vmatpush1.msra.mxu0 %v571
    %1095 = vmatprep.subr.mxu0 %v574
    %1096 = vmatpush1.msra.mxu0 %v573
    %1097 = vmatprep.subr.mxu0 %v576
    %1098 = vmatpush1.msra.mxu0 %v575
    %1099 = vmatprep.subr.mxu0 %v578
    %1100 = vmatpush1.msra.mxu0 %v577
    %1101 = vmatprep.subr.mxu0 %v580
    %1102 = vmatpush1.msra.mxu0 %v579
    %1103 = vmatprep.subr.mxu0 %v582
    %1104 = vmatpush1.msra.mxu0 %v581
    %1105 = vmatprep.subr.mxu0 %v584
    %1106 = vmatpush1.msra.mxu0 %v583
    %1107 = vmatprep.subr.mxu0 %v586
    %1108 = vmatpush1.msra.mxu0 %v585
    %1109 = vmatprep.subr.mxu0 %v588
    %1110 = vmatpush1.msra.mxu0 %v587
    %1111 = vmatprep.subr.mxu0 %v590
    %1112 = vmatpush1.msra.mxu0 %v589
    %1113 = vmatprep.subr.mxu0 %v592
    %1114 = vmatpush1.msra.mxu0 %v591
    %1115 = vmatprep.subr.mxu0 %v594
    %1116 = vmatpush1.msra.mxu0 %v593
    %1117 = vmatprep.mubr.f32.mxu0 %v275
    %1118 = vmatmul.mubr.f32.gmra.mrb[0].mxu0 %v273
    %v1119 = vpop.f32.mrb[0].mxu0
    %v1120 = vadd.f32 %v1043, %v1119
    %v1121 = vpop.f32.mrb[0].mxu0
    %v1122 = vadd.f32 %v1045, %v1121
    %1123 = vmatprep.mubr.f32.mxu0 %v281
    %1124 = vmatmul.mubr.f32.gmra.mrb[0].mxu0 %v279
    %v1125 = vpop.f32.mrb[0].mxu0
    %v1126 = vadd.f32 %v1049, %v1125
    %v1127 = vpop.f32.mrb[0].mxu0
    %v1128 = vadd.f32 %v1051, %v1127
    %1129 = vdwg.mxu0
    %1130 = vmatprep.subr.mxu0 %v662
    %1131 = vmatpush1.msra.mxu0 %v661
    %1132 = vmatprep.subr.mxu0 %v664
    %1133 = vmatpush1.msra.mxu0 %v663
    %1134 = vmatprep.subr.mxu0 %v666
    %1135 = vmatpush1.msra.mxu0 %v665
    %1136 = vmatprep.subr.mxu0 %v668
    %1137 = vmatpush1.msra.mxu0 %v667
    %1138 = vmatprep.subr.mxu0 %v670
    %1139 = vmatpush1.msra.mxu0 %v669
    %1140 = vmatprep.subr.mxu0 %v672
    %1141 = vmatpush1.msra.mxu0 %v671
    %1142 = vmatprep.subr.mxu0 %v674
    %1143 = vmatpush1.msra.mxu0 %v673
    %1144 = vmatprep.subr.mxu0 %v676
    %1145 = vmatpush1.msra.mxu0 %v675
    %1146 = vmatprep.subr.mxu0 %v678
    %1147 = vmatpush1.msra.mxu0 %v677
    %1148 = vmatprep.subr.mxu0 %v680
    %1149 = vmatpush1.msra.mxu0 %v679
    %1150 = vmatprep.subr.mxu0 %v682
    %1151 = vmatpush1.msra.mxu0 %v681
    %1152 = vmatprep.subr.mxu0 %v684
    %1153 = vmatpush1.msra.mxu0 %v683
    %1154 = vmatprep.subr.mxu0 %v686
    %1155 = vmatpush1.msra.mxu0 %v685
    %1156 = vmatprep.subr.mxu0 %v688
    %1157 = vmatpush1.msra.mxu0 %v687
    %1158 = vmatprep.subr.mxu0 %v690
    %1159 = vmatpush1.msra.mxu0 %v689
    %1160 = vmatprep.subr.mxu0 %v692
    %1161 = vmatpush1.msra.mxu0 %v691
    %1162 = vmatprep.subr.mxu0 %v694
    %1163 = vmatpush1.msra.mxu0 %v693
    %1164 = vmatprep.subr.mxu0 %v696
    %1165 = vmatpush1.msra.mxu0 %v695
    %1166 = vmatprep.subr.mxu0 %v698
    %1167 = vmatpush1.msra.mxu0 %v697
    %1168 = vmatprep.subr.mxu0 %v700
    %1169 = vmatpush1.msra.mxu0 %v699
    %1170 = vmatprep.subr.mxu0 %v702
    %1171 = vmatpush1.msra.mxu0 %v701
    %1172 = vmatprep.subr.mxu0 %v704
    %1173 = vmatpush1.msra.mxu0 %v703
    %1174 = vmatprep.subr.mxu0 %v706
    %1175 = vmatpush1.msra.mxu0 %v705
    %1176 = vmatprep.subr.mxu0 %v708
    %1177 = vmatpush1.msra.mxu0 %v707
    %1178 = vmatprep.subr.mxu0 %v710
    %1179 = vmatpush1.msra.mxu0 %v709
    %1180 = vmatprep.subr.mxu0 %v712
    %1181 = vmatpush1.msra.mxu0 %v711
    %1182 = vmatprep.subr.mxu0 %v714
    %1183 = vmatpush1.msra.mxu0 %v713
    %1184 = vmatprep.subr.mxu0 %v716
    %1185 = vmatpush1.msra.mxu0 %v715
    %1186 = vmatprep.subr.mxu0 %v718
    %1187 = vmatpush1.msra.mxu0 %v717
    %1188 = vmatprep.subr.mxu0 %v720
    %1189 = vmatpush1.msra.mxu0 %v719
    %1190 = vmatprep.subr.mxu0 %v722
    %1191 = vmatpush1.msra.mxu0 %v721
    %1192 = vmatprep.subr.mxu0 %v724
    %1193 = vmatpush1.msra.mxu0 %v723
    %1194 = vmatprep.mubr.f32.mxu0 %v523
    %1195 = vmatmul.mubr.f32.gmra.mrb[0].mxu0 %v521
    %v1196 = vpop.f32.mrb[0].mxu0
    %v1197 = vadd.f32 0.0, %v1196
    %v1198 = vpop.f32.mrb[0].mxu0
    %v1199 = vadd.f32 0.0, %v1198
    %1200 = vmatprep.mubr.f32.mxu0 %v529
    %1201 = vmatmul.mubr.f32.gmra.mrb[0].mxu0 %v527
    %v1202 = vpop.f32.mrb[0].mxu0
    %v1203 = vadd.f32 0.0, %v1202
    %v1204 = vpop.f32.mrb[0].mxu0
    %v1205 = vadd.f32 0.0, %v1204
    %1206 = vdwg.mxu0
    %v1207 = vadd.f32 %v1120, %v1197
    %v1208 = vadd.f32 %v1122, %v1199
    %v1209 = vadd.f32 %v1126, %v1203
    %v1210 = vadd.f32 %v1128, %v1205
    %v1211 = vadd.f32 %v1207, %v965
    %v1212 = vadd.f32 %v1208, %v969
    %v1213 = vadd.f32 %v1209, %v965
    %v1214 = vadd.f32 %v1210, %v969
    %vm1215 = vcmp.gt.f32.partialorder %v972, 0.0
    %vm1216 = vcmp.gt.f32.partialorder %v973, 0.0
    %vm1217 = vcmp.gt.f32.partialorder %v974, 0.0
    %vm1218 = vcmp.gt.f32.partialorder %v975, 0.0
    %v1219 = vmul.f32 %v972, 0.01
    %v1220 = vmul.f32 %v973, 0.01
    %v1221 = vmul.f32 %v974, 0.01
    %v1222 = vmul.f32 %v975, 0.01
    %v1223 = vsel %vm1215, %v972, %v1219
    %v1224 = vsel %vm1216, %v973, %v1220
    %v1225 = vsel %vm1217, %v974, %v1221
    %v1226 = vsel %vm1218, %v975, %v1222
    %vm1227 = vcmp.gt.f32.partialorder %v1211, 0.0
    %vm1228 = vcmp.gt.f32.partialorder %v1212, 0.0
    %vm1229 = vcmp.gt.f32.partialorder %v1213, 0.0
    %vm1230 = vcmp.gt.f32.partialorder %v1214, 0.0
    %v1231 = vmul.f32 %v1211, 0.01
    %v1232 = vmul.f32 %v1212, 0.01
    %v1233 = vmul.f32 %v1213, 0.01
    %v1234 = vmul.f32 %v1214, 0.01
    %v1235 = vsel %vm1227, %v1211, %v1231
    %v1236 = vsel %vm1228, %v1212, %v1232
    %v1237 = vsel %vm1229, %v1213, %v1233
    %v1238 = vsel %vm1230, %v1214, %v1234
    %v1239 = vadd.f32 %v1223, %v1225
    %v1240 = vrot.slane %v1239, 4
    %v1241 = vadd.f32 %v1239, %v1240
    %v1242 = vrot.slane %v1241, 2
    %v1243 = vadd.f32 %v1241, %v1242
    %v1244 = vrot.slane %v1243, 1
    %v1245 = vadd.f32 %v1243, %v1244
    %v1246 = vadd.f32 %v1224, %v1226
    %v1247 = vrot.slane %v1246, 4
    %v1248 = vadd.f32 %v1246, %v1247
    %v1249 = vrot.slane %v1248, 2
    %v1250 = vadd.f32 %v1248, %v1249
    %v1251 = vrot.slane %v1250, 1
    %v1252 = vadd.f32 %v1250, %v1251
    %v1253 = vadd.f32 %v1245, 0.0
    %v1254 = vadd.f32 %v1252, 0.0
    %v1255 = vadd.f32 %v1235, %v1237
    %v1256 = vrot.slane %v1255, 4
    %v1257 = vadd.f32 %v1255, %v1256
    %v1258 = vrot.slane %v1257, 2
    %v1259 = vadd.f32 %v1257, %v1258
    %v1260 = vrot.slane %v1259, 1
    %v1261 = vadd.f32 %v1259, %v1260
    %v1262 = vadd.f32 %v1236, %v1238
    %v1263 = vrot.slane %v1262, 4
    %v1264 = vadd.f32 %v1262, %v1263
    %v1265 = vrot.slane %v1264, 2
    %v1266 = vadd.f32 %v1264, %v1265
    %v1267 = vrot.slane %v1266, 1
    %v1268 = vadd.f32 %v1266, %v1267
    %v1269 = vadd.f32 %v1253, %v1261
    %v1270 = vadd.f32 %v1254, %v1268
    %v1271 = vmul.f32 %v1223, %v1223
    %v1272 = vmul.f32 %v1224, %v1224
    %v1273 = vmul.f32 %v1225, %v1225
    %v1274 = vmul.f32 %v1226, %v1226
    %v1275 = vadd.f32 %v1271, %v1273
    %v1276 = vrot.slane %v1275, 4
    %v1277 = vadd.f32 %v1275, %v1276
    %v1278 = vrot.slane %v1277, 2
    %v1279 = vadd.f32 %v1277, %v1278
    %v1280 = vrot.slane %v1279, 1
    %v1281 = vadd.f32 %v1279, %v1280
    %v1282 = vadd.f32 %v1272, %v1274
    %v1283 = vrot.slane %v1282, 4
    %v1284 = vadd.f32 %v1282, %v1283
    %v1285 = vrot.slane %v1284, 2
    %v1286 = vadd.f32 %v1284, %v1285
    %v1287 = vrot.slane %v1286, 1
    %v1288 = vadd.f32 %v1286, %v1287
    %v1289 = vadd.f32 %v1281, 0.0
    %v1290 = vadd.f32 %v1288, 0.0
    %v1291 = vmul.f32 %v1235, %v1235
    %v1292 = vmul.f32 %v1236, %v1236
    %v1293 = vmul.f32 %v1237, %v1237
    %v1294 = vmul.f32 %v1238, %v1238
    %v1295 = vadd.f32 %v1291, %v1293
    %v1296 = vrot.slane %v1295, 4
    %v1297 = vadd.f32 %v1295, %v1296
    %v1298 = vrot.slane %v1297, 2
    %v1299 = vadd.f32 %v1297, %v1298
    %v1300 = vrot.slane %v1299, 1
    %v1301 = vadd.f32 %v1299, %v1300
    %v1302 = vadd.f32 %v1292, %v1294
    %v1303 = vrot.slane %v1302, 4
    %v1304 = vadd.f32 %v1302, %v1303
    %v1305 = vrot.slane %v1304, 2
    %v1306 = vadd.f32 %v1304, %v1305
    %v1307 = vrot.slane %v1306, 1
    %v1308 = vadd.f32 %v1306, %v1307
    %v1309 = vadd.f32 %v1289, %v1301
    %v1310 = vadd.f32 %v1290, %v1308
    %v1311 = vld [vmem:[#allocation11] sm:$0xff]
    %v1312 = vld [vmem:[#allocation11 + $0x8] sm:$0xff]
    %v1313 = vld [vmem:[#allocation11 + $0x10] sm:$0xff]
    %v1314 = vld [vmem:[#allocation11 + $0x18] sm:$0xff]
    %v1315 = vld [vmem:[#allocation11 + $0x20] sm:$0xff]
    %v1316 = vld [vmem:[#allocation11 + $0x28] sm:$0xff]
    %v1317 = vld [vmem:[#allocation11 + $0x30] sm:$0xff]
    %v1318 = vld [vmem:[#allocation11 + $0x38] sm:$0xff]
    %v1319 = vld [vmem:[#allocation11 + $0x40] sm:$0xff]
    %v1320 = vld [vmem:[#allocation11 + $0x48] sm:$0xff]
    %v1321 = vld [vmem:[#allocation11 + $0x50] sm:$0xff]
    %v1322 = vld [vmem:[#allocation11 + $0x58] sm:$0xff]
    %v1323 = vld [vmem:[#allocation11 + $0x60] sm:$0xff]
    %v1324 = vld [vmem:[#allocation11 + $0x68] sm:$0xff]
    %v1325 = vld [vmem:[#allocation11 + $0x70] sm:$0xff]
    %v1326 = vld [vmem:[#allocation11 + $0x78] sm:$0xff]
    %v1327 = vld [vmem:[#allocation11 + $0x80] sm:$0xff]
    %v1328 = vld [vmem:[#allocation11 + $0x88] sm:$0xff]
    %v1329 = vld [vmem:[#allocation11 + $0x90] sm:$0xff]
    %v1330 = vld [vmem:[#allocation11 + $0x98] sm:$0xff]
    %v1331 = vld [vmem:[#allocation11 + $0xa0] sm:$0xff]
    %v1332 = vld [vmem:[#allocation11 + $0xa8] sm:$0xff]
    %v1333 = vld [vmem:[#allocation11 + $0xb0] sm:$0xff]
    %v1334 = vld [vmem:[#allocation11 + $0xb8] sm:$0xff]
    %v1335 = vld [vmem:[#allocation11 + $0xc0] sm:$0xff]
    %v1336 = vld [vmem:[#allocation11 + $0xc8] sm:$0xff]
    %v1337 = vld [vmem:[#allocation11 + $0xd0] sm:$0xff]
    %v1338 = vld [vmem:[#allocation11 + $0xd8] sm:$0xff]
    %v1339 = vld [vmem:[#allocation11 + $0xe0] sm:$0xff]
    %v1340 = vld [vmem:[#allocation11 + $0xe8] sm:$0xff]
    %v1341 = vld [vmem:[#allocation11 + $0xf0] sm:$0xff]
    %v1342 = vld [vmem:[#allocation11 + $0xf8] sm:$0xff]
    %v1343 = vld [vmem:[#allocation11 + $0x100] sm:$0xff]
    %v1344 = vld [vmem:[#allocation11 + $0x108] sm:$0xff]
    %v1345 = vld [vmem:[#allocation11 + $0x110] sm:$0xff]
    %v1346 = vld [vmem:[#allocation11 + $0x118] sm:$0xff]
    %v1347 = vld [vmem:[#allocation11 + $0x120] sm:$0xff]
    %v1348 = vld [vmem:[#allocation11 + $0x128] sm:$0xff]
    %v1349 = vld [vmem:[#allocation11 + $0x130] sm:$0xff]
    %v1350 = vld [vmem:[#allocation11 + $0x138] sm:$0xff]
    %v1351 = vld [vmem:[#allocation11 + $0x140] sm:$0xff]
    %v1352 = vld [vmem:[#allocation11 + $0x148] sm:$0xff]
    %v1353 = vld [vmem:[#allocation11 + $0x150] sm:$0xff]
    %v1354 = vld [vmem:[#allocation11 + $0x158] sm:$0xff]
    %v1355 = vld [vmem:[#allocation11 + $0x160] sm:$0xff]
    %v1356 = vld [vmem:[#allocation11 + $0x168] sm:$0xff]
    %v1357 = vld [vmem:[#allocation11 + $0x170] sm:$0xff]
    %v1358 = vld [vmem:[#allocation11 + $0x178] sm:$0xff]
    %v1359 = vld [vmem:[#allocation11 + $0x180] sm:$0xff]
    %v1360 = vld [vmem:[#allocation11 + $0x188] sm:$0xff]
    %v1361 = vld [vmem:[#allocation11 + $0x190] sm:$0xff]
    %v1362 = vld [vmem:[#allocation11 + $0x198] sm:$0xff]
    %v1363 = vld [vmem:[#allocation11 + $0x1a0] sm:$0xff]
    %v1364 = vld [vmem:[#allocation11 + $0x1a8] sm:$0xff]
    %v1365 = vld [vmem:[#allocation11 + $0x1b0] sm:$0xff]
    %v1366 = vld [vmem:[#allocation11 + $0x1b8] sm:$0xff]
    %v1367 = vld [vmem:[#allocation11 + $0x1c0] sm:$0xff]
    %v1368 = vld [vmem:[#allocation11 + $0x1c8] sm:$0xff]
    %v1369 = vld [vmem:[#allocation11 + $0x1d0] sm:$0xff]
    %v1370 = vld [vmem:[#allocation11 + $0x1d8] sm:$0xff]
    %v1371 = vld [vmem:[#allocation11 + $0x1e0] sm:$0xff]
    %v1372 = vld [vmem:[#allocation11 + $0x1e8] sm:$0xff]
    %v1373 = vld [vmem:[#allocation11 + $0x1f0] sm:$0xff]
    %v1374 = vld [vmem:[#allocation11 + $0x1f8] sm:$0xff]
    %1375 = vmatprep.subr.mxu0 %v1312
    %1376 = vmatpush1.msra.mxu0 %v1311
    %1377 = vmatprep.subr.mxu0 %v1314
    %1378 = vmatpush1.msra.mxu0 %v1313
    %1379 = vmatprep.subr.mxu0 %v1316
    %1380 = vmatpush1.msra.mxu0 %v1315
    %1381 = vmatprep.subr.mxu0 %v1318
    %1382 = vmatpush1.msra.mxu0 %v1317
    %1383 = vmatprep.subr.mxu0 %v1320
    %1384 = vmatpush1.msra.mxu0 %v1319
    %1385 = vmatprep.subr.mxu0 %v1322
    %1386 = vmatpush1.msra.mxu0 %v1321
    %1387 = vmatprep.subr.mxu0 %v1324
    %1388 = vmatpush1.msra.mxu0 %v1323
    %1389 = vmatprep.subr.mxu0 %v1326
    %1390 = vmatpush1.msra.mxu0 %v1325
    %1391 = vmatprep.subr.mxu0 %v1328
    %1392 = vmatpush1.msra.mxu0 %v1327
    %1393 = vmatprep.subr.mxu0 %v1330
    %1394 = vmatpush1.msra.mxu0 %v1329
    %1395 = vmatprep.subr.mxu0 %v1332
    %1396 = vmatpush1.msra.mxu0 %v1331
    %1397 = vmatprep.subr.mxu0 %v1334
    %1398 = vmatpush1.msra.mxu0 %v1333
    %1399 = vmatprep.subr.mxu0 %v1336
    %1400 = vmatpush1.msra.mxu0 %v1335
    %1401 = vmatprep.subr.mxu0 %v1338
    %1402 = vmatpush1.msra.mxu0 %v1337
    %1403 = vmatprep.subr.mxu0 %v1340
    %1404 = vmatpush1.msra.mxu0 %v1339
    %1405 = vmatprep.subr.mxu0 %v1342
    %1406 = vmatpush1.msra.mxu0 %v1341
    %1407 = vmatprep.subr.mxu0 %v1344
    %1408 = vmatpush1.msra.mxu0 %v1343
    %1409 = vmatprep.subr.mxu0 %v1346
    %1410 = vmatpush1.msra.mxu0 %v1345
    %1411 = vmatprep.subr.mxu0 %v1348
    %1412 = vmatpush1.msra.mxu0 %v1347
    %1413 = vmatprep.subr.mxu0 %v1350
    %1414 = vmatpush1.msra.mxu0 %v1349
    %1415 = vmatprep.subr.mxu0 %v1352
    %1416 = vmatpush1.msra.mxu0 %v1351
    %1417 = vmatprep.subr.mxu0 %v1354
    %1418 = vmatpush1.msra.mxu0 %v1353
    %1419 = vmatprep.subr.mxu0 %v1356
    %1420 = vmatpush1.msra.mxu0 %v1355
    %1421 = vmatprep.subr.mxu0 %v1358
    %1422 = vmatpush1.msra.mxu0 %v1357
    %1423 = vmatprep.subr.mxu0 %v1360
    %1424 = vmatpush1.msra.mxu0 %v1359
    %1425 = vmatprep.subr.mxu0 %v1362
    %1426 = vmatpush1.msra.mxu0 %v1361
    %1427 = vmatprep.subr.mxu0 %v1364
    %1428 = vmatpush1.msra.mxu0 %v1363
    %1429 = vmatprep.subr.mxu0 %v1366
    %1430 = vmatpush1.msra.mxu0 %v1365
    %1431 = vmatprep.subr.mxu0 %v1368
    %1432 = vmatpush1.msra.mxu0 %v1367
    %1433 = vmatprep.subr.mxu0 %v1370
    %1434 = vmatpush1.msra.mxu0 %v1369
    %1435 = vmatprep.subr.mxu0 %v1372
    %1436 = vmatpush1.msra.mxu0 %v1371
    %1437 = vmatprep.subr.mxu0 %v1374
    %1438 = vmatpush1.msra.mxu0 %v1373
    %1439 = vmatprep.mubr.f32.mxu0 %v1270
    %1440 = vmatmul.mubr.f32.gmra.mrb[0].mxu0 %v1269
    %v1441 = vpop.f32.mrb[0].mxu0
    %v1442 = vadd.f32 0.0, %v1441
    %v1443 = vpop.f32.mrb[0].mxu0
    %v1444 = vadd.f32 0.0, %v1443
    %1445 = vdwg.mxu0
    %v1446 = vmul.f32 %v1442, 0.0009765625
    %v1447 = vmul.f32 %v1444, 0.0009765625
    %1448 = vmatprep.subr.mxu0 %v1312
    %1449 = vmatpush1.msra.mxu0 %v1311
    %1450 = vmatprep.subr.mxu0 %v1314
    %1451 = vmatpush1.msra.mxu0 %v1313
    %1452 = vmatprep.subr.mxu0 %v1316
    %1453 = vmatpush1.msra.mxu0 %v1315
    %1454 = vmatprep.subr.mxu0 %v1318
    %1455 = vmatpush1.msra.mxu0 %v1317
    %1456 = vmatprep.subr.mxu0 %v1320
    %1457 = vmatpush1.msra.mxu0 %v1319
    %1458 = vmatprep.subr.mxu0 %v1322
    %1459 = vmatpush1.msra.mxu0 %v1321
    %1460 = vmatprep.subr.mxu0 %v1324
    %1461 = vmatpush1.msra.mxu0 %v1323
    %1462 = vmatprep.subr.mxu0 %v1326
    %1463 = vmatpush1.msra.mxu0 %v1325
    %1464 = vmatprep.subr.mxu0 %v1328
    %1465 = vmatpush1.msra.mxu0 %v1327
    %1466 = vmatprep.subr.mxu0 %v1330
    %1467 = vmatpush1.msra.mxu0 %v1329
    %1468 = vmatprep.subr.mxu0 %v1332
    %1469 = vmatpush1.msra.mxu0 %v1331
    %1470 = vmatprep.subr.mxu0 %v1334
    %1471 = vmatpush1.msra.mxu0 %v1333
    %1472 = vmatprep.subr.mxu0 %v1336
    %1473 = vmatpush1.msra.mxu0 %v1335
    %1474 = vmatprep.subr.mxu0 %v1338
    %1475 = vmatpush1.msra.mxu0 %v1337
    %1476 = vmatprep.subr.mxu0 %v1340
    %1477 = vmatpush1.msra.mxu0 %v1339
    %1478 = vmatprep.subr.mxu0 %v1342
    %1479 = vmatpush1.msra.mxu0 %v1341
    %1480 = vmatprep.subr.mxu0 %v1344
    %1481 = vmatpush1.msra.mxu0 %v1343
    %1482 = vmatprep.subr.mxu0 %v1346
    %1483 = vmatpush1.msra.mxu0 %v1345
    %1484 = vmatprep.subr.mxu0 %v1348
    %1485 = vmatpush1.msra.mxu0 %v1347
    %1486 = vmatprep.subr.mxu0 %v1350
    %1487 = vmatpush1.msra.mxu0 %v1349
    %1488 = vmatprep.subr.mxu0 %v1352
    %1489 = vmatpush1.msra.mxu0 %v1351
    %1490 = vmatprep.subr.mxu0 %v1354
    %1491 = vmatpush1.msra.mxu0 %v1353
    %1492 = vmatprep.subr.mxu0 %v1356
    %1493 = vmatpush1.msra.mxu0 %v1355
    %1494 = vmatprep.subr.mxu0 %v1358
    %1495 = vmatpush1.msra.mxu0 %v1357
    %1496 = vmatprep.subr.mxu0 %v1360
    %1497 = vmatpush1.msra.mxu0 %v1359
    %1498 = vmatprep.subr.mxu0 %v1362
    %1499 = vmatpush1.msra.mxu0 %v1361
    %1500 = vmatprep.subr.mxu0 %v1364
    %1501 = vmatpush1.msra.mxu0 %v1363
    %1502 = vmatprep.subr.mxu0 %v1366
    %1503 = vmatpush1.msra.mxu0 %v1365
    %1504 = vmatprep.subr.mxu0 %v1368
    %1505 = vmatpush1.msra.mxu0 %v1367
    %1506 = vmatprep.subr.mxu0 %v1370
    %1507 = vmatpush1.msra.mxu0 %v1369
    %1508 = vmatprep.subr.mxu0 %v1372
    %1509 = vmatpush1.msra.mxu0 %v1371
    %1510 = vmatprep.subr.mxu0 %v1374
    %1511 = vmatpush1.msra.mxu0 %v1373
    %1512 = vmatprep.mubr.f32.mxu0 %v1310
    %1513 = vmatmul.mubr.f32.gmra.mrb[0].mxu0 %v1309
    %v1514 = vpop.f32.mrb[0].mxu0
    %v1515 = vadd.f32 0.0, %v1514
    %v1516 = vpop.f32.mrb[0].mxu0
    %v1517 = vadd.f32 0.0, %v1516
    %1518 = vdwg.mxu0
    %v1519 = vmul.f32 %v1515, 0.0009765625
    %v1520 = vmul.f32 %v1517, 0.0009765625
    %v1521 = vmul.f32 %v1446, %v1446
    %v1522 = vmul.f32 %v1447, %v1447
    %v1523 = vsub.f32 %v1519, %v1521
    %v1524 = vsub.f32 %v1520, %v1522
    %v1525 = vld [vmem:[%s7] sm:$0x3]
    %v1526 = vadd.f32 %v1523, 1e-05
    %v1527 = vadd.f32 %v1524, 1e-05
    %v1528 = vrsqrt.pop %v1526
    %v1529 = vrsqrt.pop %v1527
    %v1532 = vcombine.low %v1528, %v1529
    %v1534 = vunpack.c.l.s4 1966171168
    %v1535 = vunpack.c.0.s8 %v1534
    %v1536 = vlaneseq
    %v1537 = vshrl.u32 %v1536, 7
    %v1538 = vsub.s32 %v1535, %v1537
    %v1539 = vrot.slane %v1532, %v1538
    %v1541 = vunpack.c.l.s4 1966171168
    %v1542 = vunpack.c.0.s8 %v1541
    %v1543 = vlaneseq
    %v1544 = vshrl.u32 %v1543, 7
    %v1545 = vsub.s32 %v1542, %v1544
    %v1546 = vrot.slane %v1539, %v1545
    %v1548 = vmul.f32 %v1525, %v1546
    %v1549 = vld [vmem:[%s8] sm:$0x3]
    %v1551 = vlaneseq
    %v1552 = vshrl.u32 %v1551, 7
    %v1553 = vsub.s32 0, %v1552
    %v1554 = vrot.slane %v1548, %v1553
    %v1555 = vlaneseq
    %v1556 = vshrl.u32 %v1555, 7
    %v1557 = vsub.s32 1, %v1556
    %v1558 = vrot.slane %v1548, %v1557
    %v1561 = vmul.f32 %v1446, %v1554
    %v1562 = vmul.f32 %v1447, %v1558
    %v1565 = vcombine.low %v1561, %v1562
    %v1567 = vunpack.c.l.s4 1966171168
    %v1568 = vunpack.c.0.s8 %v1567
    %v1569 = vlaneseq
    %v1570 = vshrl.u32 %v1569, 7
    %v1571 = vsub.s32 %v1568, %v1570
    %v1572 = vrot.slane %v1565, %v1571
    %v1574 = vunpack.c.l.s4 1966171168
    %v1575 = vunpack.c.0.s8 %v1574
    %v1576 = vlaneseq
    %v1577 = vshrl.u32 %v1576, 7
    %v1578 = vsub.s32 %v1575, %v1577
    %v1579 = vrot.slane %v1572, %v1578
    %v1581 = vsub.f32 %v1549, %v1579
    %v1582 = vmul.f32 %v1223, %v1554
    %v1583 = vmul.f32 %v1224, %v1558
    %v1584 = vmul.f32 %v1225, %v1554
    %v1585 = vmul.f32 %v1226, %v1558
    %v1587 = vlaneseq
    %v1588 = vshrl.u32 %v1587, 7
    %v1589 = vsub.s32 0, %v1588
    %v1590 = vrot.slane %v1581, %v1589
    %v1591 = vlaneseq
    %v1592 = vshrl.u32 %v1591, 7
    %v1593 = vsub.s32 1, %v1592
    %v1594 = vrot.slane %v1581, %v1593
    %v1597 = vadd.f32 %v1582, %v1590
    %v1598 = vadd.f32 %v1583, %v1594
    %v1599 = vadd.f32 %v1584, %v1590
    %v1600 = vadd.f32 %v1585, %v1594
    %v1601 = vmul.f32 %v1235, %v1554
    %v1602 = vmul.f32 %v1236, %v1558
    %v1603 = vmul.f32 %v1237, %v1554
    %v1604 = vmul.f32 %v1238, %v1558
    %v1605 = vadd.f32 %v1601, %v1590
    %v1606 = vadd.f32 %v1602, %v1594
    %v1607 = vadd.f32 %v1603, %v1590
    %v1608 = vadd.f32 %v1604, %v1594
    %v1609 = vld [vmem:[#allocation13] sm:$0xff]
    %v1610 = vld [vmem:[#allocation13 + $0x8] sm:$0xff]
    %v1611 = vld [vmem:[#allocation13 + $0x10] sm:$0xff]
    %v1612 = vld [vmem:[#allocation13 + $0x18] sm:$0xff]
    %v1613 = vld [vmem:[#allocation13 + $0x20] sm:$0xff]
    %v1614 = vld [vmem:[#allocation13 + $0x28] sm:$0xff]
    %v1615 = vld [vmem:[#allocation13 + $0x30] sm:$0xff]
    %v1616 = vld [vmem:[#allocation13 + $0x38] sm:$0xff]
    %v1617 = vld [vmem:[#allocation13 + $0x40] sm:$0xff]
    %v1618 = vld [vmem:[#allocation13 + $0x48] sm:$0xff]
    %v1619 = vld [vmem:[#allocation13 + $0x50] sm:$0xff]
    %v1620 = vld [vmem:[#allocation13 + $0x58] sm:$0xff]
    %v1621 = vld [vmem:[#allocation13 + $0x60] sm:$0xff]
    %v1622 = vld [vmem:[#allocation13 + $0x68] sm:$0xff]
    %v1623 = vld [vmem:[#allocation13 + $0x70] sm:$0xff]
    %v1624 = vld [vmem:[#allocation13 + $0x78] sm:$0xff]
    %v1625 = vld [vmem:[#allocation13 + $0x80] sm:$0xff]
    %v1626 = vld [vmem:[#allocation13 + $0x88] sm:$0xff]
    %v1627 = vld [vmem:[#allocation13 + $0x90] sm:$0xff]
    %v1628 = vld [vmem:[#allocation13 + $0x98] sm:$0xff]
    %v1629 = vld [vmem:[#allocation13 + $0xa0] sm:$0xff]
    %v1630 = vld [vmem:[#allocation13 + $0xa8] sm:$0xff]
    %v1631 = vld [vmem:[#allocation13 + $0xb0] sm:$0xff]
    %v1632 = vld [vmem:[#allocation13 + $0xb8] sm:$0xff]
    %v1633 = vld [vmem:[#allocation13 + $0xc0] sm:$0xff]
    %v1634 = vld [vmem:[#allocation13 + $0xc8] sm:$0xff]
    %v1635 = vld [vmem:[#allocation13 + $0xd0] sm:$0xff]
    %v1636 = vld [vmem:[#allocation13 + $0xd8] sm:$0xff]
    %v1637 = vld [vmem:[#allocation13 + $0xe0] sm:$0xff]
    %v1638 = vld [vmem:[#allocation13 + $0xe8] sm:$0xff]
    %v1639 = vld [vmem:[#allocation13 + $0xf0] sm:$0xff]
    %v1640 = vld [vmem:[#allocation13 + $0xf8] sm:$0xff]
    %v1641 = vld [vmem:[#allocation13 + $0x100] sm:$0xff]
    %v1642 = vld [vmem:[#allocation13 + $0x108] sm:$0xff]
    %v1643 = vld [vmem:[#allocation13 + $0x110] sm:$0xff]
    %v1644 = vld [vmem:[#allocation13 + $0x118] sm:$0xff]
    %v1645 = vld [vmem:[#allocation13 + $0x120] sm:$0xff]
    %v1646 = vld [vmem:[#allocation13 + $0x128] sm:$0xff]
    %v1647 = vld [vmem:[#allocation13 + $0x130] sm:$0xff]
    %v1648 = vld [vmem:[#allocation13 + $0x138] sm:$0xff]
    %v1649 = vld [vmem:[#allocation13 + $0x140] sm:$0xff]
    %v1650 = vld [vmem:[#allocation13 + $0x148] sm:$0xff]
    %v1651 = vld [vmem:[#allocation13 + $0x150] sm:$0xff]
    %v1652 = vld [vmem:[#allocation13 + $0x158] sm:$0xff]
    %v1653 = vld [vmem:[#allocation13 + $0x160] sm:$0xff]
    %v1654 = vld [vmem:[#allocation13 + $0x168] sm:$0xff]
    %v1655 = vld [vmem:[#allocation13 + $0x170] sm:$0xff]
    %v1656 = vld [vmem:[#allocation13 + $0x178] sm:$0xff]
    %v1657 = vld [vmem:[#allocation13 + $0x180] sm:$0xff]
    %v1658 = vld [vmem:[#allocation13 + $0x188] sm:$0xff]
    %v1659 = vld [vmem:[#allocation13 + $0x190] sm:$0xff]
    %v1660 = vld [vmem:[#allocation13 + $0x198] sm:$0xff]
    %v1661 = vld [vmem:[#allocation13 + $0x1a0] sm:$0xff]
    %v1662 = vld [vmem:[#allocation13 + $0x1a8] sm:$0xff]
    %v1663 = vld [vmem:[#allocation13 + $0x1b0] sm:$0xff]
    %v1664 = vld [vmem:[#allocation13 + $0x1b8] sm:$0xff]
    %v1665 = vld [vmem:[#allocation13 + $0x1c0] sm:$0xff]
    %v1666 = vld [vmem:[#allocation13 + $0x1c8] sm:$0xff]
    %v1667 = vld [vmem:[#allocation13 + $0x1d0] sm:$0xff]
    %v1668 = vld [vmem:[#allocation13 + $0x1d8] sm:$0xff]
    %v1669 = vld [vmem:[#allocation13 + $0x1e0] sm:$0xff]
    %v1670 = vld [vmem:[#allocation13 + $0x1e8] sm:$0xff]
    %v1671 = vld [vmem:[#allocation13 + $0x1f0] sm:$0xff]
    %v1672 = vld [vmem:[#allocation13 + $0x1f8] sm:$0xff]
    %v1673 = vld [vmem:[%s11] sm:$0x3]
    %v1675 = vlaneseq
    %v1676 = vshrl.u32 %v1675, 7
    %v1677 = vsub.s32 0, %v1676
    %v1678 = vrot.slane %v1673, %v1677
    %v1679 = vlaneseq
    %v1680 = vshrl.u32 %v1679, 7
    %v1681 = vsub.s32 1, %v1680
    %v1682 = vrot.slane %v1673, %v1681
    %1685 = vmatprep.subr.mxu0 %v1610
    %1686 = vmatpush1.msra.mxu0 %v1609
    %1687 = vmatprep.subr.mxu0 %v1612
    %1688 = vmatpush1.msra.mxu0 %v1611
    %1689 = vmatprep.subr.mxu0 %v1614
    %1690 = vmatpush1.msra.mxu0 %v1613
    %1691 = vmatprep.subr.mxu0 %v1616
    %1692 = vmatpush1.msra.mxu0 %v1615
    %1693 = vmatprep.subr.mxu0 %v1618
    %1694 = vmatpush1.msra.mxu0 %v1617
    %1695 = vmatprep.subr.mxu0 %v1620
    %1696 = vmatpush1.msra.mxu0 %v1619
    %1697 = vmatprep.subr.mxu0 %v1622
    %1698 = vmatpush1.msra.mxu0 %v1621
    %1699 = vmatprep.subr.mxu0 %v1624
    %1700 = vmatpush1.msra.mxu0 %v1623
    %1701 = vmatprep.subr.mxu0 %v1626
    %1702 = vmatpush1.msra.mxu0 %v1625
    %1703 = vmatprep.subr.mxu0 %v1628
    %1704 = vmatpush1.msra.mxu0 %v1627
    %1705 = vmatprep.subr.mxu0 %v1630
    %1706 = vmatpush1.msra.mxu0 %v1629
    %1707 = vmatprep.subr.mxu0 %v1632
    %1708 = vmatpush1.msra.mxu0 %v1631
    %1709 = vmatprep.subr.mxu0 %v1634
    %1710 = vmatpush1.msra.mxu0 %v1633
    %1711 = vmatprep.subr.mxu0 %v1636
    %1712 = vmatpush1.msra.mxu0 %v1635
    %1713 = vmatprep.subr.mxu0 %v1638
    %1714 = vmatpush1.msra.mxu0 %v1637
    %1715 = vmatprep.subr.mxu0 %v1640
    %1716 = vmatpush1.msra.mxu0 %v1639
    %1717 = vmatprep.subr.mxu0 %v1642
    %1718 = vmatpush1.msra.mxu0 %v1641
    %1719 = vmatprep.subr.mxu0 %v1644
    %1720 = vmatpush1.msra.mxu0 %v1643
    %1721 = vmatprep.subr.mxu0 %v1646
    %1722 = vmatpush1.msra.mxu0 %v1645
    %1723 = vmatprep.subr.mxu0 %v1648
    %1724 = vmatpush1.msra.mxu0 %v1647
    %1725 = vmatprep.subr.mxu0 %v1650
    %1726 = vmatpush1.msra.mxu0 %v1649
    %1727 = vmatprep.subr.mxu0 %v1652
    %1728 = vmatpush1.msra.mxu0 %v1651
    %1729 = vmatprep.subr.mxu0 %v1654
    %1730 = vmatpush1.msra.mxu0 %v1653
    %1731 = vmatprep.subr.mxu0 %v1656
    %1732 = vmatpush1.msra.mxu0 %v1655
    %1733 = vmatprep.subr.mxu0 %v1658
    %1734 = vmatpush1.msra.mxu0 %v1657
    %1735 = vmatprep.subr.mxu0 %v1660
    %1736 = vmatpush1.msra.mxu0 %v1659
    %1737 = vmatprep.subr.mxu0 %v1662
    %1738 = vmatpush1.msra.mxu0 %v1661
    %1739 = vmatprep.subr.mxu0 %v1664
    %1740 = vmatpush1.msra.mxu0 %v1663
    %1741 = vmatprep.subr.mxu0 %v1666
    %1742 = vmatpush1.msra.mxu0 %v1665
    %1743 = vmatprep.subr.mxu0 %v1668
    %1744 = vmatpush1.msra.mxu0 %v1667
    %1745 = vmatprep.subr.mxu0 %v1670
    %1746 = vmatpush1.msra.mxu0 %v1669
    %1747 = vmatprep.subr.mxu0 %v1672
    %1748 = vmatpush1.msra.mxu0 %v1671
    %1749 = vmatprep.mubr.f32.mxu0 %v1598
    %1750 = vmatmul.mubr.f32.gmra.mrb[0].mxu0 %v1597
    %v1751 = vpop.f32.mrb[0].mxu0
    %v1752 = vadd.f32 %v1678, %v1751
    %v1753 = vpop.f32.mrb[0].mxu0
    %v1754 = vadd.f32 %v1682, %v1753
    %1755 = vmatprep.mubr.f32.mxu0 %v1600
    %1756 = vmatmul.mubr.f32.gmra.mrb[0].mxu0 %v1599
    %v1757 = vpop.f32.mrb[0].mxu0
    %v1758 = vadd.f32 %v1678, %v1757
    %v1759 = vpop.f32.mrb[0].mxu0
    %v1760 = vadd.f32 %v1682, %v1759
    %1761 = vdwg.mxu0
    %1762 = vmatprep.subr.mxu0 %v1610
    %1763 = vmatpush1.msra.mxu0 %v1609
    %1764 = vmatprep.subr.mxu0 %v1612
    %1765 = vmatpush1.msra.mxu0 %v1611
    %1766 = vmatprep.subr.mxu0 %v1614
    %1767 = vmatpush1.msra.mxu0 %v1613
    %1768 = vmatprep.subr.mxu0 %v1616
    %1769 = vmatpush1.msra.mxu0 %v1615
    %1770 = vmatprep.subr.mxu0 %v1618
    %1771 = vmatpush1.msra.mxu0 %v1617
    %1772 = vmatprep.subr.mxu0 %v1620
    %1773 = vmatpush1.msra.mxu0 %v1619
    %1774 = vmatprep.subr.mxu0 %v1622
    %1775 = vmatpush1.msra.mxu0 %v1621
    %1776 = vmatprep.subr.mxu0 %v1624
    %1777 = vmatpush1.msra.mxu0 %v1623
    %1778 = vmatprep.subr.mxu0 %v1626
    %1779 = vmatpush1.msra.mxu0 %v1625
    %1780 = vmatprep.subr.mxu0 %v1628
    %1781 = vmatpush1.msra.mxu0 %v1627
    %1782 = vmatprep.subr.mxu0 %v1630
    %1783 = vmatpush1.msra.mxu0 %v1629
    %1784 = vmatprep.subr.mxu0 %v1632
    %1785 = vmatpush1.msra.mxu0 %v1631
    %1786 = vmatprep.subr.mxu0 %v1634
    %1787 = vmatpush1.msra.mxu0 %v1633
    %1788 = vmatprep.subr.mxu0 %v1636
    %1789 = vmatpush1.msra.mxu0 %v1635
    %1790 = vmatprep.subr.mxu0 %v1638
    %1791 = vmatpush1.msra.mxu0 %v1637
    %1792 = vmatprep.subr.mxu0 %v1640
    %1793 = vmatpush1.msra.mxu0 %v1639
    %1794 = vmatprep.subr.mxu0 %v1642
    %1795 = vmatpush1.msra.mxu0 %v1641
    %1796 = vmatprep.subr.mxu0 %v1644
    %1797 = vmatpush1.msra.mxu0 %v1643
    %1798 = vmatprep.subr.mxu0 %v1646
    %1799 = vmatpush1.msra.mxu0 %v1645
    %1800 = vmatprep.subr.mxu0 %v1648
    %1801 = vmatpush1.msra.mxu0 %v1647
    %1802 = vmatprep.subr.mxu0 %v1650
    %1803 = vmatpush1.msra.mxu0 %v1649
    %1804 = vmatprep.subr.mxu0 %v1652
    %1805 = vmatpush1.msra.mxu0 %v1651
    %1806 = vmatprep.subr.mxu0 %v1654
    %1807 = vmatpush1.msra.mxu0 %v1653
    %1808 = vmatprep.subr.mxu0 %v1656
    %1809 = vmatpush1.msra.mxu0 %v1655
    %1810 = vmatprep.subr.mxu0 %v1658
    %1811 = vmatpush1.msra.mxu0 %v1657
    %1812 = vmatprep.subr.mxu0 %v1660
    %1813 = vmatpush1.msra.mxu0 %v1659
    %1814 = vmatprep.subr.mxu0 %v1662
    %1815 = vmatpush1.msra.mxu0 %v1661
    %1816 = vmatprep.subr.mxu0 %v1664
    %1817 = vmatpush1.msra.mxu0 %v1663
    %1818 = vmatprep.subr.mxu0 %v1666
    %1819 = vmatpush1.msra.mxu0 %v1665
    %1820 = vmatprep.subr.mxu0 %v1668
    %1821 = vmatpush1.msra.mxu0 %v1667
    %1822 = vmatprep.subr.mxu0 %v1670
    %1823 = vmatpush1.msra.mxu0 %v1669
    %1824 = vmatprep.subr.mxu0 %v1672
    %1825 = vmatpush1.msra.mxu0 %v1671
    %1826 = vmatprep.mubr.f32.mxu0 %v1606
    %1827 = vmatmul.mubr.f32.gmra.mrb[0].mxu0 %v1605
    %v1828 = vpop.f32.mrb[0].mxu0
    %v1829 = vadd.f32 %v1678, %v1828
    %v1830 = vpop.f32.mrb[0].mxu0
    %v1831 = vadd.f32 %v1682, %v1830
    %1832 = vmatprep.mubr.f32.mxu0 %v1608
    %1833 = vmatmul.mubr.f32.gmra.mrb[0].mxu0 %v1607
    %v1834 = vpop.f32.mrb[0].mxu0
    %v1835 = vadd.f32 %v1678, %v1834
    %v1836 = vpop.f32.mrb[0].mxu0
    %v1837 = vadd.f32 %v1682, %v1836
    %1838 = vdwg.mxu0
    %vm1839 = vcmp.gt.f32.partialorder %v1752, 0.0
    %vm1840 = vcmp.gt.f32.partialorder %v1754, 0.0
    %vm1841 = vcmp.gt.f32.partialorder %v1758, 0.0
    %vm1842 = vcmp.gt.f32.partialorder %v1760, 0.0
    %v1843 = vmul.f32 %v1752, 0.01
    %v1844 = vmul.f32 %v1754, 0.01
    %v1845 = vmul.f32 %v1758, 0.01
    %v1846 = vmul.f32 %v1760, 0.01
    %v1847 = vsel %vm1839, %v1752, %v1843
    %v1848 = vsel %vm1840, %v1754, %v1844
    %v1849 = vsel %vm1841, %v1758, %v1845
    %v1850 = vsel %vm1842, %v1760, %v1846
    %vm1851 = vcmp.gt.f32.partialorder %v1829, 0.0
    %vm1852 = vcmp.gt.f32.partialorder %v1831, 0.0
    %vm1853 = vcmp.gt.f32.partialorder %v1835, 0.0
    %vm1854 = vcmp.gt.f32.partialorder %v1837, 0.0
    %v1855 = vmul.f32 %v1829, 0.01
    %v1856 = vmul.f32 %v1831, 0.01
    %v1857 = vmul.f32 %v1835, 0.01
    %v1858 = vmul.f32 %v1837, 0.01
    %v1859 = vsel %vm1851, %v1829, %v1855
    %v1860 = vsel %vm1852, %v1831, %v1856
    %v1861 = vsel %vm1853, %v1835, %v1857
    %v1862 = vsel %vm1854, %v1837, %v1858
    %v1863 = vadd.f32 %v1847, %v1849
    %v1864 = vrot.slane %v1863, 4
    %v1865 = vadd.f32 %v1863, %v1864
    %v1866 = vrot.slane %v1865, 2
    %v1867 = vadd.f32 %v1865, %v1866
    %v1868 = vrot.slane %v1867, 1
    %v1869 = vadd.f32 %v1867, %v1868
    %v1870 = vadd.f32 %v1848, %v1850
    %v1871 = vrot.slane %v1870, 4
    %v1872 = vadd.f32 %v1870, %v1871
    %v1873 = vrot.slane %v1872, 2
    %v1874 = vadd.f32 %v1872, %v1873
    %v1875 = vrot.slane %v1874, 1
    %v1876 = vadd.f32 %v1874, %v1875
    %v1877 = vadd.f32 %v1869, 0.0
    %v1878 = vadd.f32 %v1876, 0.0
    %v1879 = vadd.f32 %v1859, %v1861
    %v1880 = vrot.slane %v1879, 4
    %v1881 = vadd.f32 %v1879, %v1880
    %v1882 = vrot.slane %v1881, 2
    %v1883 = vadd.f32 %v1881, %v1882
    %v1884 = vrot.slane %v1883, 1
    %v1885 = vadd.f32 %v1883, %v1884
    %v1886 = vadd.f32 %v1860, %v1862
    %v1887 = vrot.slane %v1886, 4
    %v1888 = vadd.f32 %v1886, %v1887
    %v1889 = vrot.slane %v1888, 2
    %v1890 = vadd.f32 %v1888, %v1889
    %v1891 = vrot.slane %v1890, 1
    %v1892 = vadd.f32 %v1890, %v1891
    %v1893 = vadd.f32 %v1877, %v1885
    %v1894 = vadd.f32 %v1878, %v1892
    %v1895 = vmul.f32 %v1847, %v1847
    %v1896 = vmul.f32 %v1848, %v1848
    %v1897 = vmul.f32 %v1849, %v1849
    %v1898 = vmul.f32 %v1850, %v1850
    %v1899 = vadd.f32 %v1895, %v1897
    %v1900 = vrot.slane %v1899, 4
    %v1901 = vadd.f32 %v1899, %v1900
    %v1902 = vrot.slane %v1901, 2
    %v1903 = vadd.f32 %v1901, %v1902
    %v1904 = vrot.slane %v1903, 1
    %v1905 = vadd.f32 %v1903, %v1904
    %v1906 = vadd.f32 %v1896, %v1898
    %v1907 = vrot.slane %v1906, 4
    %v1908 = vadd.f32 %v1906, %v1907
    %v1909 = vrot.slane %v1908, 2
    %v1910 = vadd.f32 %v1908, %v1909
    %v1911 = vrot.slane %v1910, 1
    %v1912 = vadd.f32 %v1910, %v1911
    %v1913 = vadd.f32 %v1905, 0.0
    %v1914 = vadd.f32 %v1912, 0.0
    %v1915 = vmul.f32 %v1859, %v1859
    %v1916 = vmul.f32 %v1860, %v1860
    %v1917 = vmul.f32 %v1861, %v1861
    %v1918 = vmul.f32 %v1862, %v1862
    %v1919 = vadd.f32 %v1915, %v1917
    %v1920 = vrot.slane %v1919, 4
    %v1921 = vadd.f32 %v1919, %v1920
    %v1922 = vrot.slane %v1921, 2
    %v1923 = vadd.f32 %v1921, %v1922
    %v1924 = vrot.slane %v1923, 1
    %v1925 = vadd.f32 %v1923, %v1924
    %v1926 = vadd.f32 %v1916, %v1918
    %v1927 = vrot.slane %v1926, 4
    %v1928 = vadd.f32 %v1926, %v1927
    %v1929 = vrot.slane %v1928, 2
    %v1930 = vadd.f32 %v1928, %v1929
    %v1931 = vrot.slane %v1930, 1
    %v1932 = vadd.f32 %v1930, %v1931
    %v1933 = vadd.f32 %v1913, %v1925
    %v1934 = vadd.f32 %v1914, %v1932
    %1935 = vmatprep.subr.mxu0 %v1312
    %1936 = vmatpush1.msra.mxu0 %v1311
    %1937 = vmatprep.subr.mxu0 %v1314
    %1938 = vmatpush1.msra.mxu0 %v1313
    %1939 = vmatprep.subr.mxu0 %v1316
    %1940 = vmatpush1.msra.mxu0 %v1315
    %1941 = vmatprep.subr.mxu0 %v1318
    %1942 = vmatpush1.msra.mxu0 %v1317
    %1943 = vmatprep.subr.mxu0 %v1320
    %1944 = vmatpush1.msra.mxu0 %v1319
    %1945 = vmatprep.subr.mxu0 %v1322
    %1946 = vmatpush1.msra.mxu0 %v1321
    %1947 = vmatprep.subr.mxu0 %v1324
    %1948 = vmatpush1.msra.mxu0 %v1323
    %1949 = vmatprep.subr.mxu0 %v1326
    %1950 = vmatpush1.msra.mxu0 %v1325
    %1951 = vmatprep.subr.mxu0 %v1328
    %1952 = vmatpush1.msra.mxu0 %v1327
    %1953 = vmatprep.subr.mxu0 %v1330
    %1954 = vmatpush1.msra.mxu0 %v1329
    %1955 = vmatprep.subr.mxu0 %v1332
    %1956 = vmatpush1.msra.mxu0 %v1331
    %1957 = vmatprep.subr.mxu0 %v1334
    %1958 = vmatpush1.msra.mxu0 %v1333
    %1959 = vmatprep.subr.mxu0 %v1336
    %1960 = vmatpush1.msra.mxu0 %v1335
    %1961 = vmatprep.subr.mxu0 %v1338
    %1962 = vmatpush1.msra.mxu0 %v1337
    %1963 = vmatprep.subr.mxu0 %v1340
    %1964 = vmatpush1.msra.mxu0 %v1339
    %1965 = vmatprep.subr.mxu0 %v1342
    %1966 = vmatpush1.msra.mxu0 %v1341
    %1967 = vmatprep.subr.mxu0 %v1344
    %1968 = vmatpush1.msra.mxu0 %v1343
    %1969 = vmatprep.subr.mxu0 %v1346
    %1970 = vmatpush1.msra.mxu0 %v1345
    %1971 = vmatprep.subr.mxu0 %v1348
    %1972 = vmatpush1.msra.mxu0 %v1347
    %1973 = vmatprep.subr.mxu0 %v1350
    %1974 = vmatpush1.msra.mxu0 %v1349
    %1975 = vmatprep.subr.mxu0 %v1352
    %1976 = vmatpush1.msra.mxu0 %v1351
    %1977 = vmatprep.subr.mxu0 %v1354
    %1978 = vmatpush1.msra.mxu0 %v1353
    %1979 = vmatprep.subr.mxu0 %v1356
    %1980 = vmatpush1.msra.mxu0 %v1355
    %1981 = vmatprep.subr.mxu0 %v1358
    %1982 = vmatpush1.msra.mxu0 %v1357
    %1983 = vmatprep.subr.mxu0 %v1360
    %1984 = vmatpush1.msra.mxu0 %v1359
    %1985 = vmatprep.subr.mxu0 %v1362
    %1986 = vmatpush1.msra.mxu0 %v1361
    %1987 = vmatprep.subr.mxu0 %v1364
    %1988 = vmatpush1.msra.mxu0 %v1363
    %1989 = vmatprep.subr.mxu0 %v1366
    %1990 = vmatpush1.msra.mxu0 %v1365
    %1991 = vmatprep.subr.mxu0 %v1368
    %1992 = vmatpush1.msra.mxu0 %v1367
    %1993 = vmatprep.subr.mxu0 %v1370
    %1994 = vmatpush1.msra.mxu0 %v1369
    %1995 = vmatprep.subr.mxu0 %v1372
    %1996 = vmatpush1.msra.mxu0 %v1371
    %1997 = vmatprep.subr.mxu0 %v1374
    %1998 = vmatpush1.msra.mxu0 %v1373
    %1999 = vmatprep.mubr.f32.mxu0 %v1894
    %2000 = vmatmul.mubr.f32.gmra.mrb[0].mxu0 %v1893
    %v2001 = vpop.f32.mrb[0].mxu0
    %v2002 = vadd.f32 0.0, %v2001
    %v2003 = vpop.f32.mrb[0].mxu0
    %v2004 = vadd.f32 0.0, %v2003
    %2005 = vdwg.mxu0
    %v2006 = vmul.f32 %v2002, 0.0009765625
    %v2007 = vmul.f32 %v2004, 0.0009765625
    %2008 = vmatprep.subr.mxu0 %v1312
    %2009 = vmatpush1.msra.mxu0 %v1311
    %2010 = vmatprep.subr.mxu0 %v1314
    %2011 = vmatpush1.msra.mxu0 %v1313
    %2012 = vmatprep.subr.mxu0 %v1316
    %2013 = vmatpush1.msra.mxu0 %v1315
    %2014 = vmatprep.subr.mxu0 %v1318
    %2015 = vmatpush1.msra.mxu0 %v1317
    %2016 = vmatprep.subr.mxu0 %v1320
    %2017 = vmatpush1.msra.mxu0 %v1319
    %2018 = vmatprep.subr.mxu0 %v1322
    %2019 = vmatpush1.msra.mxu0 %v1321
    %2020 = vmatprep.subr.mxu0 %v1324
    %2021 = vmatpush1.msra.mxu0 %v1323
    %2022 = vmatprep.subr.mxu0 %v1326
    %2023 = vmatpush1.msra.mxu0 %v1325
    %2024 = vmatprep.subr.mxu0 %v1328
    %2025 = vmatpush1.msra.mxu0 %v1327
    %2026 = vmatprep.subr.mxu0 %v1330
    %2027 = vmatpush1.msra.mxu0 %v1329
    %2028 = vmatprep.subr.mxu0 %v1332
    %2029 = vmatpush1.msra.mxu0 %v1331
    %2030 = vmatprep.subr.mxu0 %v1334
    %2031 = vmatpush1.msra.mxu0 %v1333
    %2032 = vmatprep.subr.mxu0 %v1336
    %2033 = vmatpush1.msra.mxu0 %v1335
    %2034 = vmatprep.subr.mxu0 %v1338
    %2035 = vmatpush1.msra.mxu0 %v1337
    %2036 = vmatprep.subr.mxu0 %v1340
    %2037 = vmatpush1.msra.mxu0 %v1339
    %2038 = vmatprep.subr.mxu0 %v1342
    %2039 = vmatpush1.msra.mxu0 %v1341
    %2040 = vmatprep.subr.mxu0 %v1344
    %2041 = vmatpush1.msra.mxu0 %v1343
    %2042 = vmatprep.subr.mxu0 %v1346
    %2043 = vmatpush1.msra.mxu0 %v1345
    %2044 = vmatprep.subr.mxu0 %v1348
    %2045 = vmatpush1.msra.mxu0 %v1347
    %2046 = vmatprep.subr.mxu0 %v1350
    %2047 = vmatpush1.msra.mxu0 %v1349
    %2048 = vmatprep.subr.mxu0 %v1352
    %2049 = vmatpush1.msra.mxu0 %v1351
    %2050 = vmatprep.subr.mxu0 %v1354
    %2051 = vmatpush1.msra.mxu0 %v1353
    %2052 = vmatprep.subr.mxu0 %v1356
    %2053 = vmatpush1.msra.mxu0 %v1355
    %2054 = vmatprep.subr.mxu0 %v1358
    %2055 = vmatpush1.msra.mxu0 %v1357
    %2056 = vmatprep.subr.mxu0 %v1360
    %2057 = vmatpush1.msra.mxu0 %v1359
    %2058 = vmatprep.subr.mxu0 %v1362
    %2059 = vmatpush1.msra.mxu0 %v1361
    %2060 = vmatprep.subr.mxu0 %v1364
    %2061 = vmatpush1.msra.mxu0 %v1363
    %2062 = vmatprep.subr.mxu0 %v1366
    %2063 = vmatpush1.msra.mxu0 %v1365
    %2064 = vmatprep.subr.mxu0 %v1368
    %2065 = vmatpush1.msra.mxu0 %v1367
    %2066 = vmatprep.subr.mxu0 %v1370
    %2067 = vmatpush1.msra.mxu0 %v1369
    %2068 = vmatprep.subr.mxu0 %v1372
    %2069 = vmatpush1.msra.mxu0 %v1371
    %2070 = vmatprep.subr.mxu0 %v1374
    %2071 = vmatpush1.msra.mxu0 %v1373
    %2072 = vmatprep.mubr.f32.mxu0 %v1934
    %2073 = vmatmul.mubr.f32.gmra.mrb[0].mxu0 %v1933
    %v2074 = vpop.f32.mrb[0].mxu0
    %v2075 = vadd.f32 0.0, %v2074
    %v2076 = vpop.f32.mrb[0].mxu0
    %v2077 = vadd.f32 0.0, %v2076
    %2078 = vdwg.mxu0
    %v2079 = vmul.f32 %v2075, 0.0009765625
    %v2080 = vmul.f32 %v2077, 0.0009765625
    %v2081 = vmul.f32 %v2006, %v2006
    %v2082 = vmul.f32 %v2007, %v2007
    %v2083 = vsub.f32 %v2079, %v2081
    %v2084 = vsub.f32 %v2080, %v2082
    %v2085 = vld [vmem:[%s12] sm:$0x3]
    %v2086 = vadd.f32 %v2083, 1e-05
    %v2087 = vadd.f32 %v2084, 1e-05
    %v2088 = vrsqrt.pop %v2086
    %v2089 = vrsqrt.pop %v2087
    %v2092 = vcombine.low %v2088, %v2089
    %v2094 = vunpack.c.l.s4 1966171168
    %v2095 = vunpack.c.0.s8 %v2094
    %v2096 = vlaneseq
    %v2097 = vshrl.u32 %v2096, 7
    %v2098 = vsub.s32 %v2095, %v2097
    %v2099 = vrot.slane %v2092, %v2098
    %v2101 = vunpack.c.l.s4 1966171168
    %v2102 = vunpack.c.0.s8 %v2101
    %v2103 = vlaneseq
    %v2104 = vshrl.u32 %v2103, 7
    %v2105 = vsub.s32 %v2102, %v2104
    %v2106 = vrot.slane %v2099, %v2105
    %v2108 = vmul.f32 %v2085, %v2106
    %v2109 = vld [vmem:[%s13] sm:$0x3]
    %v2111 = vlaneseq
    %v2112 = vshrl.u32 %v2111, 7
    %v2113 = vsub.s32 0, %v2112
    %v2114 = vrot.slane %v2108, %v2113
    %v2115 = vlaneseq
    %v2116 = vshrl.u32 %v2115, 7
    %v2117 = vsub.s32 1, %v2116
    %v2118 = vrot.slane %v2108, %v2117
    %v2121 = vmul.f32 %v2006, %v2114
    %v2122 = vmul.f32 %v2007, %v2118
    %v2125 = vcombine.low %v2121, %v2122
    %v2127 = vunpack.c.l.s4 1966171168
    %v2128 = vunpack.c.0.s8 %v2127
    %v2129 = vlaneseq
    %v2130 = vshrl.u32 %v2129, 7
    %v2131 = vsub.s32 %v2128, %v2130
    %v2132 = vrot.slane %v2125, %v2131
    %v2134 = vunpack.c.l.s4 1966171168
    %v2135 = vunpack.c.0.s8 %v2134
    %v2136 = vlaneseq
    %v2137 = vshrl.u32 %v2136, 7
    %v2138 = vsub.s32 %v2135, %v2137
    %v2139 = vrot.slane %v2132, %v2138
    %v2141 = vsub.f32 %v2109, %v2139
    %v2142 = vmul.f32 %v1847, %v2114
    %v2143 = vmul.f32 %v1848, %v2118
    %v2144 = vmul.f32 %v1849, %v2114
    %v2145 = vmul.f32 %v1850, %v2118
    %v2147 = vlaneseq
    %v2148 = vshrl.u32 %v2147, 7
    %v2149 = vsub.s32 0, %v2148
    %v2150 = vrot.slane %v2141, %v2149
    %v2151 = vlaneseq
    %v2152 = vshrl.u32 %v2151, 7
    %v2153 = vsub.s32 1, %v2152
    %v2154 = vrot.slane %v2141, %v2153
    %v2157 = vadd.f32 %v2142, %v2150
    %v2158 = vadd.f32 %v2143, %v2154
    %v2159 = vadd.f32 %v2144, %v2150
    %v2160 = vadd.f32 %v2145, %v2154
    %v2161 = vmul.f32 %v1859, %v2114
    %v2162 = vmul.f32 %v1860, %v2118
    %v2163 = vmul.f32 %v1861, %v2114
    %v2164 = vmul.f32 %v1862, %v2118
    %v2165 = vadd.f32 %v2161, %v2150
    %v2166 = vadd.f32 %v2162, %v2154
    %v2167 = vadd.f32 %v2163, %v2150
    %v2168 = vadd.f32 %v2164, %v2154
    %2169 = vst [vmem:[#allocation14] sm:$0xff] %v2157
    %2170 = vst [vmem:[#allocation14 + $0x8] sm:$0xff] %v2158
    %2171 = vst [vmem:[#allocation14 + $0x10] sm:$0xff] %v2159
    %2172 = vst [vmem:[#allocation14 + $0x18] sm:$0xff] %v2160
    %s2173 = scalar_lea.vmem [#allocation14], 32
    %2174 = vst [vmem:[%s2173] sm:$0xff] %v2165
    %2175 = vst [vmem:[%s2173 + $0x8] sm:$0xff] %v2166
    %2176 = vst [vmem:[%s2173 + $0x10] sm:$0xff] %v2167
    %2177 = vst [vmem:[%s2173 + $0x18] sm:$0xff] %v2168
    // Predicated region
    $region86: #{tpu_custom_call.1} parent=1 // pred_check
      _
    $region87: #{tpu_custom_call.1} parent=1 // pred_check_branch
      %2179 = sbr.rel (0) target = $region89
    $region88: #{tpu_custom_call.1} parent=1 // pred_region
      %s2181 = ssub.s32 1024, 1024
      %2182 = vsyncadd [#allocation4], %s2181
      %s2183 = sshll.u32 [#allocation14], 4
      %s2184 = int_to_ptr.vmem [resolvable:$true] %s2183
      %2189 = dma.vmem_to_hbm [thread:$0]  %s2184, 1024, %s14, [#allocation4], 256, 256, 16
    $region89: #{tpu_custom_call.1} parent=1 // pred_fallthru
      _
    // Predicated region
    $region90: #{tpu_custom_call.1} parent=1 // pred_check
      _
    $region91: #{tpu_custom_call.1} parent=1 // pred_check_branch
      %2191 = sbr.rel (0) target = $region93
    $region92: #{tpu_custom_call.1} parent=1 // pred_region
      %2192 = dma.done [#allocation4], 1024
    $region93: #{tpu_custom_call.1} parent=1 // pred_fallthru
      _
    %2193 = vsyncpa [#allocation3], 1
    %2194 = vsyncpa [#allocation6], 1
    %2195 = vsyncpa [#allocation9], 1
    %2196 = vsyncpa [#allocation12], 1
    %2197 = vsyncpa [#allocation4], 1

</llo_original>
